<compile_context>
chip_gen: v6e
topology: v6e:2x2x1
jax: 0.10.0
libtpu: 0.0.40
codegen_flags: <defaults>
</compile_context>

<pallas_src>
import functools
import math

import jax
import jax.numpy as jnp
from jax.experimental import pallas as pl
from jax.experimental.pallas import tpu as pltpu


def _layer_norm(x, gamma, beta, eps=1e-5):
    mu = jnp.mean(x, axis=-1, keepdims=True)
    var = jnp.mean((x - mu) ** 2, axis=-1, keepdims=True)
    return (x - mu) * jax.lax.rsqrt(var + eps) * gamma + beta


def _transformer_block_kernel(
    x_ref, mask_ref, erel_ref,
    wq_ref, bq_ref, wk_ref, bk_ref, wv_ref, bv_ref, wo_ref, bo_ref,
    ln1g_ref, ln1b_ref, w1_ref, b1_ref, w2_ref, b2_ref, ln2g_ref, ln2b_ref,
    o_ref,
    *, n_heads: int,
):
    x = x_ref[...]                                   # (S, D) f32
    xb = x.astype(jnp.bfloat16)                      # cast once per batch step
    S, D = x.shape
    hd = D // n_heads
    scale = 1.0 / math.sqrt(hd)

    # --- full-width projections: N = D fills the MXU; f32 accumulation.
    #     Scale is folded into q (covers both content and relative scores).
    q = (jnp.dot(xb, wq_ref[...], preferred_element_type=jnp.float32)
         + bq_ref[...]) * scale
    k = jnp.dot(xb, wk_ref[...], preferred_element_type=jnp.float32) + bk_ref[...]
    v = jnp.dot(xb, wv_ref[...], preferred_element_type=jnp.float32) + bv_ref[...]
    qb = q.astype(jnp.bfloat16)
    kb = k.astype(jnp.bfloat16)
    vb = v.astype(jnp.bfloat16)

    # Mask expanded in-kernel from a compact bf16 0/1 tensor (hoisted out of the
    # head loop); relative-embedding table shared across heads.
    keep = mask_ref[...] > 0.0                       # (S, S) bool
    e_rel = erel_ref[...]                            # (hd, Wp) bf16
    wp = e_rel.shape[-1]
    neg = jnp.float32(-1e9)

    # --- attention, all heads inside one grid step (static loop over heads)
    head_outs = []
    for h in range(n_heads):
        lo, hi = h * hd, (h + 1) * hd
        qh = qb[:, lo:hi]                            # (S, hd) bf16 (pre-scaled)
        kh = kb[:, lo:hi]
        vh = vb[:, lo:hi]

        # content scores: contract feature dims directly (no k transpose)
        content = jax.lax.dot_general(
            qh, kh, dimension_numbers=(((1,), (1,)), ((), ())),
            preferred_element_type=jnp.float32)      # (S, S)

        # relative-position scores via the Shaw skew trick:
        #   rel_logits[i, r] = q_i . rel_used[2S-2-r]      (one MXU matmul)
        #   rel_s[i, j]      = rel_logits[i, j + (S-1) - i] (strided XLU roll)
        rel_logits = jnp.dot(qh, e_rel,
                             preferred_element_type=jnp.float32)   # (S, Wp)
        shifted = pltpu.roll(rel_logits, shift=wp - (S - 1), axis=1,
                             stride=1, stride_axis=0)
        rel_s = shifted[:, :S]                       # (S, S)

        # masked softmax in f32
        scores = jnp.where(keep, content + rel_s, neg)
        m = jnp.max(scores, axis=-1, keepdims=True)
        p = jnp.exp(scores - m)
        l = jnp.sum(p, axis=-1, keepdims=True)
        p = p * pl.reciprocal(l, approx=True)

        head_outs.append(jnp.dot(p.astype(jnp.bfloat16), vh,
                                 preferred_element_type=jnp.float32))  # (S, hd)

    # --- ONE full-K output projection for all heads
    o_heads = jnp.concatenate(head_outs, axis=-1).astype(jnp.bfloat16)  # (S, D)
    attn_out = jnp.dot(o_heads, wo_ref[...],
                       preferred_element_type=jnp.float32) + bo_ref[...]

    # --- residual + LN1 + FFN + residual + LN2
    x1 = _layer_norm(x + attn_out, ln1g_ref[...], ln1b_ref[...])
    h1 = jnp.dot(x1.astype(jnp.bfloat16), w1_ref[...],
                 preferred_element_type=jnp.float32) + b1_ref[...]
    h1 = jnp.maximum(h1, 0.0)
    ff = jnp.dot(h1.astype(jnp.bfloat16), w2_ref[...],
                 preferred_element_type=jnp.float32) + b2_ref[...]
    o_ref[...] = _layer_norm(x1 + ff, ln2g_ref[...], ln2b_ref[...])


def transformer_block(x, attn_mask, params, *, n_heads, max_len):
    B, S, D = x.shape
    hd = D // n_heads
    d_ff = params["w1"].shape[1]
    assert S <= max_len, "skew-based relative attention assumes seq_len <= max_len"

    f32 = jnp.float32
    bf16 = jnp.bfloat16

    # compact mask (0/1) in bf16; expanded to -1e9 bias in-kernel
    mask = attn_mask.astype(bf16)                                   # (B, S, S)

    # relative table: slice to the reachable window [max_len-S, max_len+S-1),
    # flip for the skew, lane-pad, transpose to (hd, Wp)
    win = 2 * S - 1
    wp = ((win + 127) // 128) * 128
    e_used = params["rel_emb"][max_len - S: max_len + S - 1]        # (2S-1, hd)
    e_flip = e_used[::-1]
    e_pad = jnp.zeros((wp, hd), f32).at[:win].set(e_flip)
    e_rel = e_pad.T.astype(bf16)                                    # (hd, Wp)

    # full-width weights; matmul operands bf16, biases / LN params f32
    wq = params["wq"].astype(bf16)
    wk = params["wk"].astype(bf16)
    wv = params["wv"].astype(bf16)
    wo = params["wo"].astype(bf16)
    bq = params["bq"].reshape(1, D)
    bk = params["bk"].reshape(1, D)
    bv = params["bv"].reshape(1, D)
    bo = params["bo"].reshape(1, D)
    ln1g = params["ln1_g"].reshape(1, D)
    ln1b = params["ln1_b"].reshape(1, D)
    ln2g = params["ln2_g"].reshape(1, D)
    ln2b = params["ln2_b"].reshape(1, D)
    w1 = params["w1"].astype(bf16)
    b1 = params["b1"].reshape(1, d_ff)
    w2 = params["w2"].astype(bf16)
    b2 = params["b2"].reshape(1, D)

    def batch_spec(*shape):            # (B, ...) arrays, batch dim squeezed
        return pl.BlockSpec((None,) + shape, lambda b: (b,) + (0,) * len(shape))

    def const_spec(a):                 # grid-invariant: block index never changes
        return pl.BlockSpec(a.shape, lambda b, nd=a.ndim: (0,) * nd)

    in_specs = [
        batch_spec(S, D),              # x
        batch_spec(S, S),              # mask (bf16)
        const_spec(e_rel),             # relative-embedding table
        const_spec(wq), const_spec(bq),
        const_spec(wk), const_spec(bk),
        const_spec(wv), const_spec(bv),
        const_spec(wo), const_spec(bo),
        const_spec(ln1g), const_spec(ln1b),
        const_spec(w1), const_spec(b1),
        const_spec(w2), const_spec(b2),
        const_spec(ln2g), const_spec(ln2b),
    ]

    # VMEM limit: ~96 MiB on 128 MiB parts (v5e/v6e), ~48 MiB on v7x (64 MiB).
    try:
        vmem_cap = pltpu.get_tpu_info().vmem_capacity_bytes
        vmem_limit = int(min(100 * 1024 * 1024, (vmem_cap * 3) // 4))
    except Exception:
        vmem_limit = 48 * 1024 * 1024

    kernel = functools.partial(_transformer_block_kernel, n_heads=n_heads)

    return pl.pallas_call(
        kernel,
        out_shape=jax.ShapeDtypeStruct((B, S, D), f32),
        grid=(B,),
        in_specs=in_specs,
        out_specs=pl.BlockSpec((None, S, D), lambda b: (b, 0, 0)),
        compiler_params=pltpu.CompilerParams(
            dimension_semantics=("parallel",),
            vmem_limit_bytes=vmem_limit,
        ),
    )(x, mask, e_rel,
      wq, bq, wk, bk, wv, bv, wo, bo,
      ln1g, ln1b, w1, b1, w2, b2, ln2g, ln2b)


def transformer_block_ref(x, attn_mask, params, *, n_heads, max_len):
    """Pure-JAX f32 reference for correctness checking."""
    B, S, D = x.shape
    hd = D // n_heads
    scale = 1.0 / math.sqrt(hd)
    idx = jnp.clip(jnp.arange(S)[:, None] - jnp.arange(S)[None, :] + max_len - 1,
                   0, 2 * max_len - 2)
    rel = params["rel_emb"][idx]                                    # (S, S, hd)

    q = x @ params["wq"] + params["bq"]
    k = x @ params["wk"] + params["bk"]
    v = x @ params["wv"] + params["bv"]
    q = q.reshape(B, S, n_heads, hd).transpose(0, 2, 1, 3)
    k = k.reshape(B, S, n_heads, hd).transpose(0, 2, 1, 3)
    v = v.reshape(B, S, n_heads, hd).transpose(0, 2, 1, 3)
    content = jnp.einsum("bhqd,bhkd->bhqk", q, k)
    rel_s = jnp.einsum("bhqd,qkd->bhqk", q, rel)
    scores = (content + rel_s) * scale
    scores = jnp.where(attn_mask[:, None] > 0, scores, -1e9)
    p = jax.nn.softmax(scores, axis=-1)
    o = jnp.einsum("bhqk,bhkd->bhqd", p, v)
    o = o.transpose(0, 2, 1, 3).reshape(B, S, D)
    attn_out = o @ params["wo"] + params["bo"]

    def ln(y, g, b):
        mu = jnp.mean(y, -1, keepdims=True)
        var = jnp.mean((y - mu) ** 2, -1, keepdims=True)
        return (y - mu) * jax.lax.rsqrt(var + 1e-5) * g + b

    x1 = ln(x + attn_out, params["ln1_g"], params["ln1_b"])
    ff = jnp.maximum(x1 @ params["w1"] + params["b1"], 0.0) @ params["w2"] + params["b2"]
    return ln(x1 + ff, params["ln2_g"], params["ln2_b"])


def init_params(key, d_model, n_heads, d_ff, max_len):
    hd = d_model // n_heads
    ks = jax.random.split(key, 8)
    s = 0.02
    return {
        "wq": jax.random.normal(ks[0], (d_model, d_model), jnp.float32) * s,
        "wk": jax.random.normal(ks[1], (d_model, d_model), jnp.float32) * s,
        "wv": jax.random.normal(ks[2], (d_model, d_model), jnp.float32) * s,
        "wo": jax.random.normal(ks[3], (d_model, d_model), jnp.float32) * s,
        "bq": jnp.zeros((d_model,), jnp.float32),
        "bk": jnp.zeros((d_model,), jnp.float32),
        "bv": jnp.zeros((d_model,), jnp.float32),
        "bo": jnp.zeros((d_model,), jnp.float32),
        "rel_emb": jax.random.normal(ks[4], (2 * max_len - 1, hd), jnp.float32) * s,
        "ln1_g": jnp.ones((d_model,), jnp.float32),
        "ln1_b": jnp.zeros((d_model,), jnp.float32),
        "w1": jax.random.normal(ks[5], (d_model, d_ff), jnp.float32) * s,
        "b1": jnp.zeros((d_ff,), jnp.float32),
        "w2": jax.random.normal(ks[6], (d_ff, d_model), jnp.float32) * s,
        "b2": jnp.zeros((d_model,), jnp.float32),
        "ln2_g": jnp.ones((d_model,), jnp.float32),
        "ln2_b": jnp.zeros((d_model,), jnp.float32),
    }


if __name__ == "__main__":
    B, S, d_model, n_heads, d_ff, max_len = 2, 8, 32, 4, 64, 16

    key = jax.random.PRNGKey(0)
    kx, kp = jax.random.split(key)
    x = jax.random.normal(kx, (B, S, d_model), jnp.float32)
    # causal mask: 1 = attend, 0 = masked
    attn_mask = jnp.broadcast_to(
        jnp.tril(jnp.ones((S, S), jnp.float32)), (B, S, S))
    params = init_params(kp, d_model, n_heads, d_ff, max_len)

    out = transformer_block(x, attn_mask, params, n_heads=n_heads, max_len=max_len)
    out = jax.block_until_ready(out)

    ref = transformer_block_ref(x, attn_mask, params, n_heads=n_heads, max_len=max_len)
    assert out.shape == (B, S, d_model)
    # bf16 matmul operands + approx reciprocal -> loosened tolerance vs f32 ref
    assert jnp.allclose(out, ref, rtol=2e-2, atol=2e-2), "mismatch vs JAX reference"

    print("KERNEL_OK")
</pallas_src>

<mosaic_0001>
module attributes {stable_mosaic.version = 11 : i64} {
  func.func @_transformer_block_kernel(%arg0: i32, %arg1: memref<1x8x32xf32, #tpu.memory_space<vmem>>, %arg2: memref<1x8x8xbf16, #tpu.memory_space<vmem>>, %arg3: memref<8x128xbf16, #tpu.memory_space<vmem>>, %arg4: memref<32x32xbf16, #tpu.memory_space<vmem>>, %arg5: memref<1x32xf32, #tpu.memory_space<vmem>>, %arg6: memref<32x32xbf16, #tpu.memory_space<vmem>>, %arg7: memref<1x32xf32, #tpu.memory_space<vmem>>, %arg8: memref<32x32xbf16, #tpu.memory_space<vmem>>, %arg9: memref<1x32xf32, #tpu.memory_space<vmem>>, %arg10: memref<32x32xbf16, #tpu.memory_space<vmem>>, %arg11: memref<1x32xf32, #tpu.memory_space<vmem>>, %arg12: memref<1x32xf32, #tpu.memory_space<vmem>>, %arg13: memref<1x32xf32, #tpu.memory_space<vmem>>, %arg14: memref<32x64xbf16, #tpu.memory_space<vmem>>, %arg15: memref<1x64xf32, #tpu.memory_space<vmem>>, %arg16: memref<64x32xbf16, #tpu.memory_space<vmem>>, %arg17: memref<1x32xf32, #tpu.memory_space<vmem>>, %arg18: memref<1x32xf32, #tpu.memory_space<vmem>>, %arg19: memref<1x32xf32, #tpu.memory_space<vmem>>, %arg20: memref<1x8x32xf32, #tpu.memory_space<vmem>>) attributes {dimension_semantics = [#tpu.dimension_semantics<parallel>], iteration_bounds = array<i64: 2>, scalar_prefetch = 0 : i64, scratch_operands = 0 : i64, tpu.core_type = #tpu.core_type<tc>, window_params = [{transform_indices = @transform_0, window_bounds = array<i64: 1, 8, 32>}, {transform_indices = @transform_1, window_bounds = array<i64: 1, 8, 8>}, {pipeline_mode = #tpu.pipeline_mode<synchronous>, transform_indices = @transform_2, window_bounds = array<i64: 8, 128>}, {pipeline_mode = #tpu.pipeline_mode<synchronous>, transform_indices = @transform_3, window_bounds = array<i64: 32, 32>}, {pipeline_mode = #tpu.pipeline_mode<synchronous>, transform_indices = @transform_4, window_bounds = array<i64: 1, 32>}, {pipeline_mode = #tpu.pipeline_mode<synchronous>, transform_indices = @transform_5, window_bounds = array<i64: 32, 32>}, {pipeline_mode = #tpu.pipeline_mode<synchronous>, transform_indices = @transform_6, window_bounds = array<i64: 1, 32>}, {pipeline_mode = #tpu.pipeline_mode<synchronous>, transform_indices = @transform_7, window_bounds = array<i64: 32, 32>}, {pipeline_mode = #tpu.pipeline_mode<synchronous>, transform_indices = @transform_8, window_bounds = array<i64: 1, 32>}, {pipeline_mode = #tpu.pipeline_mode<synchronous>, transform_indices = @transform_9, window_bounds = array<i64: 32, 32>}, {pipeline_mode = #tpu.pipeline_mode<synchronous>, transform_indices = @transform_10, window_bounds = array<i64: 1, 32>}, {pipeline_mode = #tpu.pipeline_mode<synchronous>, transform_indices = @transform_11, window_bounds = array<i64: 1, 32>}, {pipeline_mode = #tpu.pipeline_mode<synchronous>, transform_indices = @transform_12, window_bounds = array<i64: 1, 32>}, {pipeline_mode = #tpu.pipeline_mode<synchronous>, transform_indices = @transform_13, window_bounds = array<i64: 32, 64>}, {pipeline_mode = #tpu.pipeline_mode<synchronous>, transform_indices = @transform_14, window_bounds = array<i64: 1, 64>}, {pipeline_mode = #tpu.pipeline_mode<synchronous>, transform_indices = @transform_15, window_bounds = array<i64: 64, 32>}, {pipeline_mode = #tpu.pipeline_mode<synchronous>, transform_indices = @transform_16, window_bounds = array<i64: 1, 32>}, {pipeline_mode = #tpu.pipeline_mode<synchronous>, transform_indices = @transform_17, window_bounds = array<i64: 1, 32>}, {pipeline_mode = #tpu.pipeline_mode<synchronous>, transform_indices = @transform_18, window_bounds = array<i64: 1, 32>}, {transform_indices = @transform_19, window_bounds = array<i64: 1, 8, 32>}]} {
    %c0 = arith.constant 0 : index
    %c0_0 = arith.constant 0 : index
    %c0_1 = arith.constant 0 : index
    %0 = vector.load %arg1[%c0, %c0_0, %c0_1] : memref<1x8x32xf32, #tpu.memory_space<vmem>>, vector<1x8x32xf32>
    %1 = vector.shape_cast %0 : vector<1x8x32xf32> to vector<8x32xf32>
    %2 = arith.truncf %1 : vector<8x32xf32> to vector<8x32xbf16>
    %c0_2 = arith.constant 0 : index
    %c0_3 = arith.constant 0 : index
    %3 = vector.load %arg4[%c0_2, %c0_3] : memref<32x32xbf16, #tpu.memory_space<vmem>>, vector<32x32xbf16>
    %cst = arith.constant dense<0.000000e+00> : vector<8x32xf32>
    %4 = tpu.matmul %2, %3, %cst {dimension_numbers = #tpu.dot_dimension_numbers<[1], [0], [0], [1], [0, 0, 1, 1], [], []>} : vector<8x32xbf16>, vector<32x32xbf16>, vector<8x32xf32> -> vector<8x32xf32>
    %c0_4 = arith.constant 0 : index
    %c0_5 = arith.constant 0 : index
    %5 = vector.load %arg5[%c0_4, %c0_5] : memref<1x32xf32, #tpu.memory_space<vmem>>, vector<1x32xf32>
    %6 = vector.broadcast %5 : vector<1x32xf32> to vector<8x32xf32>
    %7 = arith.addf %4, %6 : vector<8x32xf32>
    %cst_6 = arith.constant 0.353553385 : f32
    %8 = vector.broadcast %cst_6 : f32 to vector<8x32xf32>
    %9 = arith.mulf %7, %8 : vector<8x32xf32>
    %c0_7 = arith.constant 0 : index
    %c0_8 = arith.constant 0 : index
    %10 = vector.load %arg6[%c0_7, %c0_8] : memref<32x32xbf16, #tpu.memory_space<vmem>>, vector<32x32xbf16>
    %cst_9 = arith.constant dense<0.000000e+00> : vector<8x32xf32>
    %11 = tpu.matmul %2, %10, %cst_9 {dimension_numbers = #tpu.dot_dimension_numbers<[1], [0], [0], [1], [0, 0, 1, 1], [], []>} : vector<8x32xbf16>, vector<32x32xbf16>, vector<8x32xf32> -> vector<8x32xf32>
    %c0_10 = arith.constant 0 : index
    %c0_11 = arith.constant 0 : index
    %12 = vector.load %arg7[%c0_10, %c0_11] : memref<1x32xf32, #tpu.memory_space<vmem>>, vector<1x32xf32>
    %13 = vector.broadcast %12 : vector<1x32xf32> to vector<8x32xf32>
    %14 = arith.addf %11, %13 : vector<8x32xf32>
    %c0_12 = arith.constant 0 : index
    %c0_13 = arith.constant 0 : index
    %15 = vector.load %arg8[%c0_12, %c0_13] : memref<32x32xbf16, #tpu.memory_space<vmem>>, vector<32x32xbf16>
    %cst_14 = arith.constant dense<0.000000e+00> : vector<8x32xf32>
    %16 = tpu.matmul %2, %15, %cst_14 {dimension_numbers = #tpu.dot_dimension_numbers<[1], [0], [0], [1], [0, 0, 1, 1], [], []>} : vector<8x32xbf16>, vector<32x32xbf16>, vector<8x32xf32> -> vector<8x32xf32>
    %c0_15 = arith.constant 0 : index
    %c0_16 = arith.constant 0 : index
    %17 = vector.load %arg9[%c0_15, %c0_16] : memref<1x32xf32, #tpu.memory_space<vmem>>, vector<1x32xf32>
    %18 = vector.broadcast %17 : vector<1x32xf32> to vector<8x32xf32>
    %19 = arith.addf %16, %18 : vector<8x32xf32>
    %20 = arith.truncf %9 : vector<8x32xf32> to vector<8x32xbf16>
    %21 = arith.truncf %14 : vector<8x32xf32> to vector<8x32xbf16>
    %22 = arith.truncf %19 : vector<8x32xf32> to vector<8x32xbf16>
    %c0_17 = arith.constant 0 : index
    %c0_18 = arith.constant 0 : index
    %c0_19 = arith.constant 0 : index
    %23 = vector.load %arg2[%c0_17, %c0_18, %c0_19] : memref<1x8x8xbf16, #tpu.memory_space<vmem>>, vector<1x8x8xbf16>
    %24 = vector.shape_cast %23 : vector<1x8x8xbf16> to vector<8x8xbf16>
    %cst_20 = arith.constant 0.000000e+00 : bf16
    %25 = vector.broadcast %cst_20 : bf16 to vector<8x8xbf16>
    %26 = arith.cmpf ogt, %24, %25 : vector<8x8xbf16>
    %c0_21 = arith.constant 0 : index
    %c0_22 = arith.constant 0 : index
    %27 = vector.load %arg3[%c0_21, %c0_22] : memref<8x128xbf16, #tpu.memory_space<vmem>>, vector<8x128xbf16>
    %28 = vector.extract_strided_slice %20 {offsets = [0, 0], sizes = [8, 8], strides = [1, 1]} : vector<8x32xbf16> to vector<8x8xbf16>
    %29 = vector.extract_strided_slice %21 {offsets = [0, 0], sizes = [8, 8], strides = [1, 1]} : vector<8x32xbf16> to vector<8x8xbf16>
    %30 = vector.extract_strided_slice %22 {offsets = [0, 0], sizes = [8, 8], strides = [1, 1]} : vector<8x32xbf16> to vector<8x8xbf16>
    %cst_23 = arith.constant dense<0.000000e+00> : vector<8x8xf32>
    %31 = tpu.matmul %28, %29, %cst_23 {dimension_numbers = #tpu.dot_dimension_numbers<[1], [1], [0], [0], [0, 0, 1, 0], [], []>} : vector<8x8xbf16>, vector<8x8xbf16>, vector<8x8xf32> -> vector<8x8xf32>
    %cst_24 = arith.constant dense<0.000000e+00> : vector<8x128xf32>
    %32 = tpu.matmul %28, %27, %cst_24 {dimension_numbers = #tpu.dot_dimension_numbers<[1], [0], [0], [1], [0, 0, 1, 1], [], []>} : vector<8x8xbf16>, vector<8x128xbf16>, vector<8x128xf32> -> vector<8x128xf32>
    %c121_i32 = arith.constant 121 : i32
    %33 = tpu.dynamic_rotate %32 by %c121_i32 dim 1 {stride = 1 : si32, stride_dimension = 0 : si32} : vector<8x128xf32>, i32 -> vector<8x128xf32>
    %34 = vector.extract_strided_slice %33 {offsets = [0, 0], sizes = [8, 8], strides = [1, 1]} : vector<8x128xf32> to vector<8x8xf32>
    %35 = arith.addf %31, %34 : vector<8x8xf32>
    %cst_25 = arith.constant -1.000000e+09 : f32
    %36 = vector.broadcast %cst_25 : f32 to vector<8x8xf32>
    %37 = arith.select %26, %35, %36 : vector<8x8xi1>, vector<8x8xf32>
    %cst_26 = arith.constant dense<0xFF800000> : vector<8xf32>
    %38 = vector.multi_reduction <maximumf>, %37, %cst_26 [1] : vector<8x8xf32> to vector<8xf32>
    %39 = vector.shape_cast %38 : vector<8xf32> to vector<8x1xf32>
    %40 = vector.broadcast %39 : vector<8x1xf32> to vector<8x8xf32>
    %41 = arith.subf %37, %40 : vector<8x8xf32>
    %42 = math.exp %41 : vector<8x8xf32>
    %cst_27 = arith.constant dense<0.000000e+00> : vector<8xf32>
    %43 = vector.multi_reduction <add>, %42, %cst_27 [1] : vector<8x8xf32> to vector<8xf32>
    %44 = vector.shape_cast %43 : vector<8xf32> to vector<8x1xf32>
    %45 = tpu.reciprocal %44 {approx = true} : vector<8x1xf32> -> vector<8x1xf32>
    %46 = vector.broadcast %45 : vector<8x1xf32> to vector<8x8xf32>
    %47 = arith.mulf %42, %46 : vector<8x8xf32>
    %48 = arith.truncf %47 : vector<8x8xf32> to vector<8x8xbf16>
    %cst_28 = arith.constant dense<0.000000e+00> : vector<8x8xf32>
    %49 = tpu.matmul %48, %30, %cst_28 {dimension_numbers = #tpu.dot_dimension_numbers<[1], [0], [0], [1], [0, 0, 1, 1], [], []>} : vector<8x8xbf16>, vector<8x8xbf16>, vector<8x8xf32> -> vector<8x8xf32>
    %50 = vector.extract_strided_slice %20 {offsets = [0, 8], sizes = [8, 8], strides = [1, 1]} : vector<8x32xbf16> to vector<8x8xbf16>
    %51 = vector.extract_strided_slice %21 {offsets = [0, 8], sizes = [8, 8], strides = [1, 1]} : vector<8x32xbf16> to vector<8x8xbf16>
    %52 = vector.extract_strided_slice %22 {offsets = [0, 8], sizes = [8, 8], strides = [1, 1]} : vector<8x32xbf16> to vector<8x8xbf16>
    %cst_29 = arith.constant dense<0.000000e+00> : vector<8x8xf32>
    %53 = tpu.matmul %50, %51, %cst_29 {dimension_numbers = #tpu.dot_dimension_numbers<[1], [1], [0], [0], [0, 0, 1, 0], [], []>} : vector<8x8xbf16>, vector<8x8xbf16>, vector<8x8xf32> -> vector<8x8xf32>
    %cst_30 = arith.constant dense<0.000000e+00> : vector<8x128xf32>
    %54 = tpu.matmul %50, %27, %cst_30 {dimension_numbers = #tpu.dot_dimension_numbers<[1], [0], [0], [1], [0, 0, 1, 1], [], []>} : vector<8x8xbf16>, vector<8x128xbf16>, vector<8x128xf32> -> vector<8x128xf32>
    %c121_i32_31 = arith.constant 121 : i32
    %55 = tpu.dynamic_rotate %54 by %c121_i32_31 dim 1 {stride = 1 : si32, stride_dimension = 0 : si32} : vector<8x128xf32>, i32 -> vector<8x128xf32>
    %56 = vector.extract_strided_slice %55 {offsets = [0, 0], sizes = [8, 8], strides = [1, 1]} : vector<8x128xf32> to vector<8x8xf32>
    %57 = arith.addf %53, %56 : vector<8x8xf32>
    %cst_32 = arith.constant -1.000000e+09 : f32
    %58 = vector.broadcast %cst_32 : f32 to vector<8x8xf32>
    %59 = arith.select %26, %57, %58 : vector<8x8xi1>, vector<8x8xf32>
    %cst_33 = arith.constant dense<0xFF800000> : vector<8xf32>
    %60 = vector.multi_reduction <maximumf>, %59, %cst_33 [1] : vector<8x8xf32> to vector<8xf32>
    %61 = vector.shape_cast %60 : vector<8xf32> to vector<8x1xf32>
    %62 = vector.broadcast %61 : vector<8x1xf32> to vector<8x8xf32>
    %63 = arith.subf %59, %62 : vector<8x8xf32>
    %64 = math.exp %63 : vector<8x8xf32>
    %cst_34 = arith.constant dense<0.000000e+00> : vector<8xf32>
    %65 = vector.multi_reduction <add>, %64, %cst_34 [1] : vector<8x8xf32> to vector<8xf32>
    %66 = vector.shape_cast %65 : vector<8xf32> to vector<8x1xf32>
    %67 = tpu.reciprocal %66 {approx = true} : vector<8x1xf32> -> vector<8x1xf32>
    %68 = vector.broadcast %67 : vector<8x1xf32> to vector<8x8xf32>
    %69 = arith.mulf %64, %68 : vector<8x8xf32>
    %70 = arith.truncf %69 : vector<8x8xf32> to vector<8x8xbf16>
    %cst_35 = arith.constant dense<0.000000e+00> : vector<8x8xf32>
    %71 = tpu.matmul %70, %52, %cst_35 {dimension_numbers = #tpu.dot_dimension_numbers<[1], [0], [0], [1], [0, 0, 1, 1], [], []>} : vector<8x8xbf16>, vector<8x8xbf16>, vector<8x8xf32> -> vector<8x8xf32>
    %72 = vector.extract_strided_slice %20 {offsets = [0, 16], sizes = [8, 8], strides = [1, 1]} : vector<8x32xbf16> to vector<8x8xbf16>
    %73 = vector.extract_strided_slice %21 {offsets = [0, 16], sizes = [8, 8], strides = [1, 1]} : vector<8x32xbf16> to vector<8x8xbf16>
    %74 = vector.extract_strided_slice %22 {offsets = [0, 16], sizes = [8, 8], strides = [1, 1]} : vector<8x32xbf16> to vector<8x8xbf16>
    %cst_36 = arith.constant dense<0.000000e+00> : vector<8x8xf32>
    %75 = tpu.matmul %72, %73, %cst_36 {dimension_numbers = #tpu.dot_dimension_numbers<[1], [1], [0], [0], [0, 0, 1, 0], [], []>} : vector<8x8xbf16>, vector<8x8xbf16>, vector<8x8xf32> -> vector<8x8xf32>
    %cst_37 = arith.constant dense<0.000000e+00> : vector<8x128xf32>
    %76 = tpu.matmul %72, %27, %cst_37 {dimension_numbers = #tpu.dot_dimension_numbers<[1], [0], [0], [1], [0, 0, 1, 1], [], []>} : vector<8x8xbf16>, vector<8x128xbf16>, vector<8x128xf32> -> vector<8x128xf32>
    %c121_i32_38 = arith.constant 121 : i32
    %77 = tpu.dynamic_rotate %76 by %c121_i32_38 dim 1 {stride = 1 : si32, stride_dimension = 0 : si32} : vector<8x128xf32>, i32 -> vector<8x128xf32>
    %78 = vector.extract_strided_slice %77 {offsets = [0, 0], sizes = [8, 8], strides = [1, 1]} : vector<8x128xf32> to vector<8x8xf32>
    %79 = arith.addf %75, %78 : vector<8x8xf32>
    %cst_39 = arith.constant -1.000000e+09 : f32
    %80 = vector.broadcast %cst_39 : f32 to vector<8x8xf32>
    %81 = arith.select %26, %79, %80 : vector<8x8xi1>, vector<8x8xf32>
    %cst_40 = arith.constant dense<0xFF800000> : vector<8xf32>
    %82 = vector.multi_reduction <maximumf>, %81, %cst_40 [1] : vector<8x8xf32> to vector<8xf32>
    %83 = vector.shape_cast %82 : vector<8xf32> to vector<8x1xf32>
    %84 = vector.broadcast %83 : vector<8x1xf32> to vector<8x8xf32>
    %85 = arith.subf %81, %84 : vector<8x8xf32>
    %86 = math.exp %85 : vector<8x8xf32>
    %cst_41 = arith.constant dense<0.000000e+00> : vector<8xf32>
    %87 = vector.multi_reduction <add>, %86, %cst_41 [1] : vector<8x8xf32> to vector<8xf32>
    %88 = vector.shape_cast %87 : vector<8xf32> to vector<8x1xf32>
    %89 = tpu.reciprocal %88 {approx = true} : vector<8x1xf32> -> vector<8x1xf32>
    %90 = vector.broadcast %89 : vector<8x1xf32> to vector<8x8xf32>
    %91 = arith.mulf %86, %90 : vector<8x8xf32>
    %92 = arith.truncf %91 : vector<8x8xf32> to vector<8x8xbf16>
    %cst_42 = arith.constant dense<0.000000e+00> : vector<8x8xf32>
    %93 = tpu.matmul %92, %74, %cst_42 {dimension_numbers = #tpu.dot_dimension_numbers<[1], [0], [0], [1], [0, 0, 1, 1], [], []>} : vector<8x8xbf16>, vector<8x8xbf16>, vector<8x8xf32> -> vector<8x8xf32>
    %94 = vector.extract_strided_slice %20 {offsets = [0, 24], sizes = [8, 8], strides = [1, 1]} : vector<8x32xbf16> to vector<8x8xbf16>
    %95 = vector.extract_strided_slice %21 {offsets = [0, 24], sizes = [8, 8], strides = [1, 1]} : vector<8x32xbf16> to vector<8x8xbf16>
    %96 = vector.extract_strided_slice %22 {offsets = [0, 24], sizes = [8, 8], strides = [1, 1]} : vector<8x32xbf16> to vector<8x8xbf16>
    %cst_43 = arith.constant dense<0.000000e+00> : vector<8x8xf32>
    %97 = tpu.matmul %94, %95, %cst_43 {dimension_numbers = #tpu.dot_dimension_numbers<[1], [1], [0], [0], [0, 0, 1, 0], [], []>} : vector<8x8xbf16>, vector<8x8xbf16>, vector<8x8xf32> -> vector<8x8xf32>
    %cst_44 = arith.constant dense<0.000000e+00> : vector<8x128xf32>
    %98 = tpu.matmul %94, %27, %cst_44 {dimension_numbers = #tpu.dot_dimension_numbers<[1], [0], [0], [1], [0, 0, 1, 1], [], []>} : vector<8x8xbf16>, vector<8x128xbf16>, vector<8x128xf32> -> vector<8x128xf32>
    %c121_i32_45 = arith.constant 121 : i32
    %99 = tpu.dynamic_rotate %98 by %c121_i32_45 dim 1 {stride = 1 : si32, stride_dimension = 0 : si32} : vector<8x128xf32>, i32 -> vector<8x128xf32>
    %100 = vector.extract_strided_slice %99 {offsets = [0, 0], sizes = [8, 8], strides = [1, 1]} : vector<8x128xf32> to vector<8x8xf32>
    %101 = arith.addf %97, %100 : vector<8x8xf32>
    %cst_46 = arith.constant -1.000000e+09 : f32
    %102 = vector.broadcast %cst_46 : f32 to vector<8x8xf32>
    %103 = arith.select %26, %101, %102 : vector<8x8xi1>, vector<8x8xf32>
    %cst_47 = arith.constant dense<0xFF800000> : vector<8xf32>
    %104 = vector.multi_reduction <maximumf>, %103, %cst_47 [1] : vector<8x8xf32> to vector<8xf32>
    %105 = vector.shape_cast %104 : vector<8xf32> to vector<8x1xf32>
    %106 = vector.broadcast %105 : vector<8x1xf32> to vector<8x8xf32>
    %107 = arith.subf %103, %106 : vector<8x8xf32>
    %108 = math.exp %107 : vector<8x8xf32>
    %cst_48 = arith.constant dense<0.000000e+00> : vector<8xf32>
    %109 = vector.multi_reduction <add>, %108, %cst_48 [1] : vector<8x8xf32> to vector<8xf32>
    %110 = vector.shape_cast %109 : vector<8xf32> to vector<8x1xf32>
    %111 = tpu.reciprocal %110 {approx = true} : vector<8x1xf32> -> vector<8x1xf32>
    %112 = vector.broadcast %111 : vector<8x1xf32> to vector<8x8xf32>
    %113 = arith.mulf %108, %112 : vector<8x8xf32>
    %114 = arith.truncf %113 : vector<8x8xf32> to vector<8x8xbf16>
    %cst_49 = arith.constant dense<0.000000e+00> : vector<8x8xf32>
    %115 = tpu.matmul %114, %96, %cst_49 {dimension_numbers = #tpu.dot_dimension_numbers<[1], [0], [0], [1], [0, 0, 1, 1], [], []>} : vector<8x8xbf16>, vector<8x8xbf16>, vector<8x8xf32> -> vector<8x8xf32>
    %116 = tpu.concatenate %49, %71, %93, %115 in 1 : vector<8x8xf32>, vector<8x8xf32>, vector<8x8xf32>, vector<8x8xf32> -> vector<8x32xf32>
    %117 = arith.truncf %116 : vector<8x32xf32> to vector<8x32xbf16>
    %c0_50 = arith.constant 0 : index
    %c0_51 = arith.constant 0 : index
    %118 = vector.load %arg10[%c0_50, %c0_51] : memref<32x32xbf16, #tpu.memory_space<vmem>>, vector<32x32xbf16>
    %cst_52 = arith.constant dense<0.000000e+00> : vector<8x32xf32>
    %119 = tpu.matmul %117, %118, %cst_52 {dimension_numbers = #tpu.dot_dimension_numbers<[1], [0], [0], [1], [0, 0, 1, 1], [], []>} : vector<8x32xbf16>, vector<32x32xbf16>, vector<8x32xf32> -> vector<8x32xf32>
    %c0_53 = arith.constant 0 : index
    %c0_54 = arith.constant 0 : index
    %120 = vector.load %arg11[%c0_53, %c0_54] : memref<1x32xf32, #tpu.memory_space<vmem>>, vector<1x32xf32>
    %121 = vector.broadcast %120 : vector<1x32xf32> to vector<8x32xf32>
    %122 = arith.addf %119, %121 : vector<8x32xf32>
    %123 = arith.addf %1, %122 : vector<8x32xf32>
    %c0_55 = arith.constant 0 : index
    %c0_56 = arith.constant 0 : index
    %124 = vector.load %arg12[%c0_55, %c0_56] : memref<1x32xf32, #tpu.memory_space<vmem>>, vector<1x32xf32>
    %c0_57 = arith.constant 0 : index
    %c0_58 = arith.constant 0 : index
    %125 = vector.load %arg13[%c0_57, %c0_58] : memref<1x32xf32, #tpu.memory_space<vmem>>, vector<1x32xf32>
    %cst_59 = arith.constant dense<0.000000e+00> : vector<8xf32>
    %126 = vector.multi_reduction <add>, %123, %cst_59 [1] : vector<8x32xf32> to vector<8xf32>
    %127 = vector.shape_cast %126 : vector<8xf32> to vector<8x1xf32>
    %cst_60 = arith.constant 3.200000e+01 : f32
    %128 = vector.broadcast %cst_60 : f32 to vector<8x1xf32>
    %129 = arith.divf %127, %128 : vector<8x1xf32>
    %130 = vector.broadcast %129 : vector<8x1xf32> to vector<8x32xf32>
    %131 = arith.subf %123, %130 : vector<8x32xf32>
    %132 = arith.mulf %131, %131 : vector<8x32xf32>
    %cst_61 = arith.constant dense<0.000000e+00> : vector<8xf32>
    %133 = vector.multi_reduction <add>, %132, %cst_61 [1] : vector<8x32xf32> to vector<8xf32>
    %134 = vector.shape_cast %133 : vector<8xf32> to vector<8x1xf32>
    %cst_62 = arith.constant 3.200000e+01 : f32
    %135 = vector.broadcast %cst_62 : f32 to vector<8x1xf32>
    %136 = arith.divf %134, %135 : vector<8x1xf32>
    %137 = vector.broadcast %129 : vector<8x1xf32> to vector<8x32xf32>
    %138 = arith.subf %123, %137 : vector<8x32xf32>
    %cst_63 = arith.constant 9.99999974E-6 : f32
    %139 = vector.broadcast %cst_63 : f32 to vector<8x1xf32>
    %140 = arith.addf %136, %139 : vector<8x1xf32>
    %141 = math.rsqrt %140 : vector<8x1xf32>
    %142 = vector.broadcast %141 : vector<8x1xf32> to vector<8x32xf32>
    %143 = arith.mulf %138, %142 : vector<8x32xf32>
    %144 = vector.broadcast %124 : vector<1x32xf32> to vector<8x32xf32>
    %145 = arith.mulf %143, %144 : vector<8x32xf32>
    %146 = vector.broadcast %125 : vector<1x32xf32> to vector<8x32xf32>
    %147 = arith.addf %145, %146 : vector<8x32xf32>
    %148 = arith.truncf %147 : vector<8x32xf32> to vector<8x32xbf16>
    %c0_64 = arith.constant 0 : index
    %c0_65 = arith.constant 0 : index
    %149 = vector.load %arg14[%c0_64, %c0_65] : memref<32x64xbf16, #tpu.memory_space<vmem>>, vector<32x64xbf16>
    %cst_66 = arith.constant dense<0.000000e+00> : vector<8x64xf32>
    %150 = tpu.matmul %148, %149, %cst_66 {dimension_numbers = #tpu.dot_dimension_numbers<[1], [0], [0], [1], [0, 0, 1, 1], [], []>} : vector<8x32xbf16>, vector<32x64xbf16>, vector<8x64xf32> -> vector<8x64xf32>
    %c0_67 = arith.constant 0 : index
    %c0_68 = arith.constant 0 : index
    %151 = vector.load %arg15[%c0_67, %c0_68] : memref<1x64xf32, #tpu.memory_space<vmem>>, vector<1x64xf32>
    %152 = vector.broadcast %151 : vector<1x64xf32> to vector<8x64xf32>
    %153 = arith.addf %150, %152 : vector<8x64xf32>
    %cst_69 = arith.constant 0.000000e+00 : f32
    %154 = vector.broadcast %cst_69 : f32 to vector<8x64xf32>
    %155 = arith.maximumf %153, %154 : vector<8x64xf32>
    %156 = arith.truncf %155 : vector<8x64xf32> to vector<8x64xbf16>
    %c0_70 = arith.constant 0 : index
    %c0_71 = arith.constant 0 : index
    %157 = vector.load %arg16[%c0_70, %c0_71] : memref<64x32xbf16, #tpu.memory_space<vmem>>, vector<64x32xbf16>
    %cst_72 = arith.constant dense<0.000000e+00> : vector<8x32xf32>
    %158 = tpu.matmul %156, %157, %cst_72 {dimension_numbers = #tpu.dot_dimension_numbers<[1], [0], [0], [1], [0, 0, 1, 1], [], []>} : vector<8x64xbf16>, vector<64x32xbf16>, vector<8x32xf32> -> vector<8x32xf32>
    %c0_73 = arith.constant 0 : index
    %c0_74 = arith.constant 0 : index
    %159 = vector.load %arg17[%c0_73, %c0_74] : memref<1x32xf32, #tpu.memory_space<vmem>>, vector<1x32xf32>
    %160 = vector.broadcast %159 : vector<1x32xf32> to vector<8x32xf32>
    %161 = arith.addf %158, %160 : vector<8x32xf32>
    %162 = arith.addf %147, %161 : vector<8x32xf32>
    %c0_75 = arith.constant 0 : index
    %c0_76 = arith.constant 0 : index
    %163 = vector.load %arg18[%c0_75, %c0_76] : memref<1x32xf32, #tpu.memory_space<vmem>>, vector<1x32xf32>
    %c0_77 = arith.constant 0 : index
    %c0_78 = arith.constant 0 : index
    %164 = vector.load %arg19[%c0_77, %c0_78] : memref<1x32xf32, #tpu.memory_space<vmem>>, vector<1x32xf32>
    %cst_79 = arith.constant dense<0.000000e+00> : vector<8xf32>
    %165 = vector.multi_reduction <add>, %162, %cst_79 [1] : vector<8x32xf32> to vector<8xf32>
    %166 = vector.shape_cast %165 : vector<8xf32> to vector<8x1xf32>
    %cst_80 = arith.constant 3.200000e+01 : f32
    %167 = vector.broadcast %cst_80 : f32 to vector<8x1xf32>
    %168 = arith.divf %166, %167 : vector<8x1xf32>
    %169 = vector.broadcast %168 : vector<8x1xf32> to vector<8x32xf32>
    %170 = arith.subf %162, %169 : vector<8x32xf32>
    %171 = arith.mulf %170, %170 : vector<8x32xf32>
    %cst_81 = arith.constant dense<0.000000e+00> : vector<8xf32>
    %172 = vector.multi_reduction <add>, %171, %cst_81 [1] : vector<8x32xf32> to vector<8xf32>
    %173 = vector.shape_cast %172 : vector<8xf32> to vector<8x1xf32>
    %cst_82 = arith.constant 3.200000e+01 : f32
    %174 = vector.broadcast %cst_82 : f32 to vector<8x1xf32>
    %175 = arith.divf %173, %174 : vector<8x1xf32>
    %176 = vector.broadcast %168 : vector<8x1xf32> to vector<8x32xf32>
    %177 = arith.subf %162, %176 : vector<8x32xf32>
    %cst_83 = arith.constant 9.99999974E-6 : f32
    %178 = vector.broadcast %cst_83 : f32 to vector<8x1xf32>
    %179 = arith.addf %175, %178 : vector<8x1xf32>
    %180 = math.rsqrt %179 : vector<8x1xf32>
    %181 = vector.broadcast %180 : vector<8x1xf32> to vector<8x32xf32>
    %182 = arith.mulf %177, %181 : vector<8x32xf32>
    %183 = vector.broadcast %163 : vector<1x32xf32> to vector<8x32xf32>
    %184 = arith.mulf %182, %183 : vector<8x32xf32>
    %185 = vector.broadcast %164 : vector<1x32xf32> to vector<8x32xf32>
    %186 = arith.addf %184, %185 : vector<8x32xf32>
    %c0_84 = arith.constant 0 : index
    %c0_85 = arith.constant 0 : index
    %c0_86 = arith.constant 0 : index
    %187 = vector.load %arg20[%c0_84, %c0_85, %c0_86] : memref<1x8x32xf32, #tpu.memory_space<vmem>>, vector<1x8x32xf32>
    %188 = vector.shape_cast %187 : vector<1x8x32xf32> to vector<8x32xf32>
    %189 = vector.shape_cast %186 : vector<8x32xf32> to vector<1x8x32xf32>
    tpu.vector_store %arg20[%c0_84, %c0_85, %c0_86], %189 {strides = array<i32>} : memref<1x8x32xf32, #tpu.memory_space<vmem>>, vector<1x8x32xf32>,
    return
  }
  func.func @transform_0(%arg0: i32) -> (i32, i32, i32) {
    %c0_i32 = arith.constant 0 : i32
    %c0_i32_0 = arith.constant 0 : i32
    %c0_i32_1 = arith.constant 0 : i32
    return %arg0, %c0_i32, %c0_i32_0 : i32, i32, i32
  }
  func.func @transform_1(%arg0: i32) -> (i32, i32, i32) {
    %c0_i32 = arith.constant 0 : i32
    %c0_i32_0 = arith.constant 0 : i32
    %c0_i32_1 = arith.constant 0 : i32
    return %arg0, %c0_i32, %c0_i32_0 : i32, i32, i32
  }
  func.func @transform_2(%arg0: i32) -> (i32, i32) {
    %c0_i32 = arith.constant 0 : i32
    %c0_i32_0 = arith.constant 0 : i32
    %c0_i32_1 = arith.constant 0 : i32
    return %c0_i32, %c0_i32_0 : i32, i32
  }
  func.func @transform_3(%arg0: i32) -> (i32, i32) {
    %c0_i32 = arith.constant 0 : i32
    %c0_i32_0 = arith.constant 0 : i32
    %c0_i32_1 = arith.constant 0 : i32
    return %c0_i32, %c0_i32_0 : i32, i32
  }
  func.func @transform_4(%arg0: i32) -> (i32, i32) {
    %c0_i32 = arith.constant 0 : i32
    %c0_i32_0 = arith.constant 0 : i32
    %c0_i32_1 = arith.constant 0 : i32
    return %c0_i32, %c0_i32_0 : i32, i32
  }
  func.func @transform_5(%arg0: i32) -> (i32, i32) {
    %c0_i32 = arith.constant 0 : i32
    %c0_i32_0 = arith.constant 0 : i32
    %c0_i32_1 = arith.constant 0 : i32
    return %c0_i32, %c0_i32_0 : i32, i32
  }
  func.func @transform_6(%arg0: i32) -> (i32, i32) {
    %c0_i32 = arith.constant 0 : i32
    %c0_i32_0 = arith.constant 0 : i32
    %c0_i32_1 = arith.constant 0 : i32
    return %c0_i32, %c0_i32_0 : i32, i32
  }
  func.func @transform_7(%arg0: i32) -> (i32, i32) {
    %c0_i32 = arith.constant 0 : i32
    %c0_i32_0 = arith.constant 0 : i32
    %c0_i32_1 = arith.constant 0 : i32
    return %c0_i32, %c0_i32_0 : i32, i32
  }
  func.func @transform_8(%arg0: i32) -> (i32, i32) {
    %c0_i32 = arith.constant 0 : i32
    %c0_i32_0 = arith.constant 0 : i32
    %c0_i32_1 = arith.constant 0 : i32
    return %c0_i32, %c0_i32_0 : i32, i32
  }
  func.func @transform_9(%arg0: i32) -> (i32, i32) {
    %c0_i32 = arith.constant 0 : i32
    %c0_i32_0 = arith.constant 0 : i32
    %c0_i32_1 = arith.constant 0 : i32
    return %c0_i32, %c0_i32_0 : i32, i32
  }
  func.func @transform_10(%arg0: i32) -> (i32, i32) {
    %c0_i32 = arith.constant 0 : i32
    %c0_i32_0 = arith.constant 0 : i32
    %c0_i32_1 = arith.constant 0 : i32
    return %c0_i32, %c0_i32_0 : i32, i32
  }
  func.func @transform_11(%arg0: i32) -> (i32, i32) {
    %c0_i32 = arith.constant 0 : i32
    %c0_i32_0 = arith.constant 0 : i32
    %c0_i32_1 = arith.constant 0 : i32
    return %c0_i32, %c0_i32_0 : i32, i32
  }
  func.func @transform_12(%arg0: i32) -> (i32, i32) {
    %c0_i32 = arith.constant 0 : i32
    %c0_i32_0 = arith.constant 0 : i32
    %c0_i32_1 = arith.constant 0 : i32
    return %c0_i32, %c0_i32_0 : i32, i32
  }
  func.func @transform_13(%arg0: i32) -> (i32, i32) {
    %c0_i32 = arith.constant 0 : i32
    %c0_i32_0 = arith.constant 0 : i32
    %c0_i32_1 = arith.constant 0 : i32
    return %c0_i32, %c0_i32_0 : i32, i32
  }
  func.func @transform_14(%arg0: i32) -> (i32, i32) {
    %c0_i32 = arith.constant 0 : i32
    %c0_i32_0 = arith.constant 0 : i32
    %c0_i32_1 = arith.constant 0 : i32
    return %c0_i32, %c0_i32_0 : i32, i32
  }
  func.func @transform_15(%arg0: i32) -> (i32, i32) {
    %c0_i32 = arith.constant 0 : i32
    %c0_i32_0 = arith.constant 0 : i32
    %c0_i32_1 = arith.constant 0 : i32
    return %c0_i32, %c0_i32_0 : i32, i32
  }
  func.func @transform_16(%arg0: i32) -> (i32, i32) {
    %c0_i32 = arith.constant 0 : i32
    %c0_i32_0 = arith.constant 0 : i32
    %c0_i32_1 = arith.constant 0 : i32
    return %c0_i32, %c0_i32_0 : i32, i32
  }
  func.func @transform_17(%arg0: i32) -> (i32, i32) {
    %c0_i32 = arith.constant 0 : i32
    %c0_i32_0 = arith.constant 0 : i32
    %c0_i32_1 = arith.constant 0 : i32
    return %c0_i32, %c0_i32_0 : i32, i32
  }
  func.func @transform_18(%arg0: i32) -> (i32, i32) {
    %c0_i32 = arith.constant 0 : i32
    %c0_i32_0 = arith.constant 0 : i32
    %c0_i32_1 = arith.constant 0 : i32
    return %c0_i32, %c0_i32_0 : i32, i32
  }
  func.func @transform_19(%arg0: i32) -> (i32, i32, i32) {
    %c0_i32 = arith.constant 0 : i32
    %c0_i32_0 = arith.constant 0 : i32
    %c0_i32_1 = arith.constant 0 : i32
    return %arg0, %c0_i32, %c0_i32_0 : i32, i32, i32
  }
}

</mosaic_0001>

<llo_original>
// kernel: tpu_custom_call.1
$region0: #{tpu_custom_call.1}
  #allocation0 [shape = 'u32[]', space=smem, size = 0x4, offset = 0x4, fixed_abs, tag = 'smem constant byte address 0x4 - core index']
  #allocation1 [shape = 'u32[144,128]{1,0:T(1,128)}', space=vmem, size = 0x12000, scoped, tag = 'internal scratch']
  %s0 = inlined_call_operand.vmem [shape: f32[2,8,32], index: 0, kind: input, shape index: {}]
  %s1 = inlined_call_operand.hbm [shape: bf16[2,8,8], index: 1, kind: input, shape index: {}]
  %s2 = inlined_call_operand.hbm [shape: bf16[8,128], index: 2, kind: input, shape index: {}]
  %s3 = inlined_call_operand.vmem [shape: bf16[32,32], index: 3, kind: input, shape index: {}]
  %s4 = inlined_call_operand.vmem [shape: f32[1,32], index: 4, kind: input, shape index: {}]
  %s5 = inlined_call_operand.vmem [shape: bf16[32,32], index: 5, kind: input, shape index: {}]
  %s6 = inlined_call_operand.vmem [shape: f32[1,32], index: 6, kind: input, shape index: {}]
  %s7 = inlined_call_operand.hbm [shape: bf16[32,32], index: 7, kind: input, shape index: {}]
  %s8 = inlined_call_operand.vmem [shape: f32[1,32], index: 8, kind: input, shape index: {}]
  %s9 = inlined_call_operand.hbm [shape: bf16[32,32], index: 9, kind: input, shape index: {}]
  %s10 = inlined_call_operand.vmem [shape: f32[1,32], index: 10, kind: input, shape index: {}]
  %s11 = inlined_call_operand.vmem [shape: f32[1,32], index: 11, kind: input, shape index: {}]
  %s12 = inlined_call_operand.vmem [shape: f32[1,32], index: 12, kind: input, shape index: {}]
  %s13 = inlined_call_operand.hbm [shape: bf16[32,64], index: 13, kind: input, shape index: {}]
  %s14 = inlined_call_operand.vmem [shape: f32[1,64], index: 14, kind: input, shape index: {}]
  %s15 = inlined_call_operand.vmem [shape: bf16[64,32], index: 15, kind: input, shape index: {}]
  %s16 = inlined_call_operand.vmem [shape: f32[1,32], index: 16, kind: input, shape index: {}]
  %s17 = inlined_call_operand.vmem [shape: f32[1,32], index: 17, kind: input, shape index: {}]
  %s18 = inlined_call_operand.vmem [shape: f32[1,32], index: 18, kind: input, shape index: {}]
  %s19 = inlined_call_operand.hbm [shape: f32[2,8,32], index: 19, kind: output, shape index: {}]
  %s20 = sld [smem:[#allocation0]]
  $region129: #{tpu_custom_call.1} parent=0
    _
  %s22 = ssub.s32 1, %s20
  %s23 = scalar_select 0, %s22, %s20
  $region1: #{tpu_custom_call.1} parent=0
    #allocation2 [shape = 'u8[4096]{0}', space=vmem, size = 0x1000, scoped, tag = 'input window, operand 1']
    #allocation3 [shape = 's32[2]{0}', space=sflag, size = 0x8, scoped, tag = 'scoped memory for tpu_custom_call.1']
    #allocation4 [shape = 's32[2]{0}', space=sflag, size = 0x8, scoped, tag = 'scoped memory for tpu_custom_call.1']
    #allocation5 [shape = 'u8[2048]{0}', space=vmem, size = 0x800, scoped, tag = 'input window, operand 2, single buffered']
    #allocation6 [shape = 's32[1]{0}', space=sflag, size = 0x4, scoped, tag = 'scoped memory for tpu_custom_call.1']
    #allocation7 [shape = 'u8[8192]{0}', space=vmem, size = 0x2000, scoped, tag = 'input window, operand 7, single buffered']
    #allocation8 [shape = 'u8[8192]{0}', space=vmem, size = 0x2000, scoped, tag = 'input window, operand 9, single buffered']
    #allocation9 [shape = 's32[1]{0}', space=sflag, size = 0x4, scoped, tag = 'scoped memory for tpu_custom_call.1']
    #allocation10 [shape = 'u8[8192]{0}', space=vmem, size = 0x2000, scoped, tag = 'input window, operand 13, single buffered']
    #allocation11 [shape = 'u8[8192]{0}', space=vmem, size = 0x2000, scoped, tag = 'output window, operand 0']
    %24 = vsyncpa [#allocation3], 0
    %s25 = scalar_lea.sflag [#allocation3], 1
    %26 = vsyncpa %s25, 0
    %27 = vsyncpa [#allocation6], 0
    %28 = vsyncpa [#allocation9], 0
    %29 = vsyncpa [#allocation4], 0
    %s30 = scalar_lea.sflag [#allocation4], 1
    %31 = vsyncpa %s30, 0
    loop: start=0, step=1, limit=4
    $region2: #{tpu_custom_call.1} parent=1 // loop_pre_header
      _
    $region3: #{tpu_custom_call.1} parent=1 // loop_header
      %s33 = sphi 0, %s37
      %p34 = scmp.ge.s32.totalorder %s33, 4
      %s43 = sphi 0, %s45
      %s46 = sphi 0, %s43
      %s47 = sphi 0, %s46
      %s63 = sphi 0, %s47
      %s69 = sphi 0, %s71
      %s72 = sphi 0, %s69
      %s73 = sphi 0, %s72
      %s89 = sphi 0, %s73
      %s93 = sphi 0, %s93
      %s95 = sphi 0, %s93
      %s96 = sphi 0, %s95
      %s110 = sphi 0, %s96
      %s114 = sphi 0, %s114
      %s116 = sphi 0, %s114
      %s117 = sphi 0, %s116
      %s131 = sphi 0, %s117
      %s135 = sphi 0, %s135
      %s137 = sphi 0, %s135
      %s138 = sphi 0, %s137
      %s152 = sphi 0, %s138
      %s156 = sphi 0, %s156
      %s158 = sphi 0, %s156
      %s159 = sphi 0, %s158
      %s173 = sphi 0, %s159
      %s177 = sphi 0, %s177
      %s179 = sphi 0, %s177
      %s180 = sphi 0, %s179
      %s194 = sphi 0, %s180
      %s198 = sphi 0, %s198
      %s200 = sphi 0, %s198
      %s201 = sphi 0, %s200
      %s215 = sphi 0, %s201
      %s219 = sphi 0, %s219
      %s221 = sphi 0, %s219
      %s222 = sphi 0, %s221
      %s236 = sphi 0, %s222
      %s240 = sphi 0, %s240
      %s242 = sphi 0, %s240
      %s243 = sphi 0, %s242
      %s257 = sphi 0, %s243
      %s261 = sphi 0, %s261
      %s263 = sphi 0, %s261
      %s264 = sphi 0, %s263
      %s278 = sphi 0, %s264
      %s282 = sphi 0, %s282
      %s284 = sphi 0, %s282
      %s285 = sphi 0, %s284
      %s299 = sphi 0, %s285
      %s303 = sphi 0, %s303
      %s305 = sphi 0, %s303
      %s306 = sphi 0, %s305
      %s320 = sphi 0, %s306
      %s324 = sphi 0, %s324
      %s326 = sphi 0, %s324
      %s327 = sphi 0, %s326
      %s341 = sphi 0, %s327
      %s345 = sphi 0, %s345
      %s347 = sphi 0, %s345
      %s348 = sphi 0, %s347
      %s362 = sphi 0, %s348
      %s366 = sphi 0, %s366
      %s368 = sphi 0, %s366
      %s369 = sphi 0, %s368
      %s383 = sphi 0, %s369
      %s387 = sphi 0, %s387
      %s389 = sphi 0, %s387
      %s390 = sphi 0, %s389
      %s404 = sphi 0, %s390
      %s408 = sphi 0, %s408
      %s410 = sphi 0, %s408
      %s411 = sphi 0, %s410
      %s425 = sphi 0, %s411
      %s429 = sphi 0, %s429
      %s431 = sphi 0, %s429
      %s432 = sphi 0, %s431
      %s446 = sphi 0, %s432
      %s452 = sphi 0, %s454
      %s455 = sphi 0, %s452
      %s456 = sphi 0, %s455
      %s472 = sphi 0, %s456
    $region4: #{tpu_custom_call.1} parent=1 // loop_header_branch
      %36 = sbr.rel (%p34) target = $region8
    $region5: #{tpu_custom_call.1} parent=1 // loop_body
      %s38 = ssub.s32 %s33, 1
      %s39 = ssub.s32 %s33, 2
      %s40 = sadd.s32 %s33, 1
      %s41 = ssub.s32 %s33, %s40
      %p42 = scmp.eq.s32.totalorder %s41, 0
      %s44 = sadd.s32 %s43, 1
      %s45 = scalar_select %p42, %s43, %s44
      %p48 = pneg %p42
      %p49 = scmp.eq.s32.totalorder %s33, 1
      %p50 = por %p48, %p49
      %p51 = scmp.ne.s32.totalorder %s43, %s46
      %p52 = scmp.eq.s32.totalorder %s33, 0
      %p53 = por %p51, %p52
      %p54 = scmp.ne.s32.totalorder %s43, %s46
      %p55 = scmp.eq.s32.totalorder %s38, 1
      %p56 = por %p54, %p55
      %p57 = scmp.ne.s32.totalorder %s46, %s47
      %p58 = scmp.eq.s32.totalorder %s38, 0
      %p59 = por %p57, %p58
      %p60 = scmp.ne.s32.totalorder %s46, %s47
      %p61 = scmp.eq.s32.totalorder %s39, 1
      %p62 = por %p60, %p61
      %p64 = scmp.ne.s32.totalorder %s47, %s63
      %p65 = scmp.eq.s32.totalorder %s39, 0
      %p66 = por %p64, %p65
      %s67 = ssub.s32 %s33, %s40
      %p68 = scmp.eq.s32.totalorder %s67, 0
      %s70 = sadd.s32 %s69, 1
      %s71 = scalar_select %p68, %s69, %s70
      %p74 = pneg %p68
      %p75 = scmp.eq.s32.totalorder %s33, 1
      %p76 = por %p74, %p75
      %p77 = scmp.ne.s32.totalorder %s69, %s72
      %p78 = scmp.eq.s32.totalorder %s33, 0
      %p79 = por %p77, %p78
      %p80 = scmp.ne.s32.totalorder %s69, %s72
      %p81 = scmp.eq.s32.totalorder %s38, 1
      %p82 = por %p80, %p81
      %p83 = scmp.ne.s32.totalorder %s72, %s73
      %p84 = scmp.eq.s32.totalorder %s38, 0
      %p85 = por %p83, %p84
      %p86 = scmp.ne.s32.totalorder %s72, %s73
      %p87 = scmp.eq.s32.totalorder %s39, 1
      %p88 = por %p86, %p87
      %p90 = scmp.ne.s32.totalorder %s73, %s89
      %p91 = scmp.eq.s32.totalorder %s39, 0
      %p92 = por %p90, %p91
      %s94 = sadd.s32 %s93, 1
      %p97 = scmp.eq.s32.totalorder %s33, 1
      %p98 = scmp.ne.s32.totalorder %s93, %s95
      %p99 = scmp.eq.s32.totalorder %s33, 0
      %p100 = por %p98, %p99
      %p101 = scmp.ne.s32.totalorder %s93, %s95
      %p102 = scmp.eq.s32.totalorder %s38, 1
      %p103 = por %p101, %p102
      %p104 = scmp.ne.s32.totalorder %s95, %s96
      %p105 = scmp.eq.s32.totalorder %s38, 0
      %p106 = por %p104, %p105
      %p107 = scmp.ne.s32.totalorder %s95, %s96
      %p108 = scmp.eq.s32.totalorder %s39, 1
      %p109 = por %p107, %p108
      %p111 = scmp.ne.s32.totalorder %s96, %s110
      %p112 = scmp.eq.s32.totalorder %s39, 0
      %p113 = por %p111, %p112
      %s115 = sadd.s32 %s114, 1
      %p118 = scmp.eq.s32.totalorder %s33, 1
      %p119 = scmp.ne.s32.totalorder %s114, %s116
      %p120 = scmp.eq.s32.totalorder %s33, 0
      %p121 = por %p119, %p120
      %p122 = scmp.ne.s32.totalorder %s114, %s116
      %p123 = scmp.eq.s32.totalorder %s38, 1
      %p124 = por %p122, %p123
      %p125 = scmp.ne.s32.totalorder %s116, %s117
      %p126 = scmp.eq.s32.totalorder %s38, 0
      %p127 = por %p125, %p126
      %p128 = scmp.ne.s32.totalorder %s116, %s117
      %p129 = scmp.eq.s32.totalorder %s39, 1
      %p130 = por %p128, %p129
      %p132 = scmp.ne.s32.totalorder %s117, %s131
      %p133 = scmp.eq.s32.totalorder %s39, 0
      %p134 = por %p132, %p133
      %s136 = sadd.s32 %s135, 1
      %p139 = scmp.eq.s32.totalorder %s33, 1
      %p140 = scmp.ne.s32.totalorder %s135, %s137
      %p141 = scmp.eq.s32.totalorder %s33, 0
      %p142 = por %p140, %p141
      %p143 = scmp.ne.s32.totalorder %s135, %s137
      %p144 = scmp.eq.s32.totalorder %s38, 1
      %p145 = por %p143, %p144
      %p146 = scmp.ne.s32.totalorder %s137, %s138
      %p147 = scmp.eq.s32.totalorder %s38, 0
      %p148 = por %p146, %p147
      %p149 = scmp.ne.s32.totalorder %s137, %s138
      %p150 = scmp.eq.s32.totalorder %s39, 1
      %p151 = por %p149, %p150
      %p153 = scmp.ne.s32.totalorder %s138, %s152
      %p154 = scmp.eq.s32.totalorder %s39, 0
      %p155 = por %p153, %p154
      %s157 = sadd.s32 %s156, 1
      %p160 = scmp.eq.s32.totalorder %s33, 1
      %p161 = scmp.ne.s32.totalorder %s156, %s158
      %p162 = scmp.eq.s32.totalorder %s33, 0
      %p163 = por %p161, %p162
      %p164 = scmp.ne.s32.totalorder %s156, %s158
      %p165 = scmp.eq.s32.totalorder %s38, 1
      %p166 = por %p164, %p165
      %p167 = scmp.ne.s32.totalorder %s158, %s159
      %p168 = scmp.eq.s32.totalorder %s38, 0
      %p169 = por %p167, %p168
      %p170 = scmp.ne.s32.totalorder %s158, %s159
      %p171 = scmp.eq.s32.totalorder %s39, 1
      %p172 = por %p170, %p171
      %p174 = scmp.ne.s32.totalorder %s159, %s173
      %p175 = scmp.eq.s32.totalorder %s39, 0
      %p176 = por %p174, %p175
      %s178 = sadd.s32 %s177, 1
      %p181 = scmp.eq.s32.totalorder %s33, 1
      %p182 = scmp.ne.s32.totalorder %s177, %s179
      %p183 = scmp.eq.s32.totalorder %s33, 0
      %p184 = por %p182, %p183
      %p185 = scmp.ne.s32.totalorder %s177, %s179
      %p186 = scmp.eq.s32.totalorder %s38, 1
      %p187 = por %p185, %p186
      %p188 = scmp.ne.s32.totalorder %s179, %s180
      %p189 = scmp.eq.s32.totalorder %s38, 0
      %p190 = por %p188, %p189
      %p191 = scmp.ne.s32.totalorder %s179, %s180
      %p192 = scmp.eq.s32.totalorder %s39, 1
      %p193 = por %p191, %p192
      %p195 = scmp.ne.s32.totalorder %s180, %s194
      %p196 = scmp.eq.s32.totalorder %s39, 0
      %p197 = por %p195, %p196
      %s199 = sadd.s32 %s198, 1
      %p202 = scmp.eq.s32.totalorder %s33, 1
      %p203 = scmp.ne.s32.totalorder %s198, %s200
      %p204 = scmp.eq.s32.totalorder %s33, 0
      %p205 = por %p203, %p204
      %p206 = scmp.ne.s32.totalorder %s198, %s200
      %p207 = scmp.eq.s32.totalorder %s38, 1
      %p208 = por %p206, %p207
      %p209 = scmp.ne.s32.totalorder %s200, %s201
      %p210 = scmp.eq.s32.totalorder %s38, 0
      %p211 = por %p209, %p210
      %p212 = scmp.ne.s32.totalorder %s200, %s201
      %p213 = scmp.eq.s32.totalorder %s39, 1
      %p214 = por %p212, %p213
      %p216 = scmp.ne.s32.totalorder %s201, %s215
      %p217 = scmp.eq.s32.totalorder %s39, 0
      %p218 = por %p216, %p217
      %s220 = sadd.s32 %s219, 1
      %p223 = scmp.eq.s32.totalorder %s33, 1
      %p224 = scmp.ne.s32.totalorder %s219, %s221
      %p225 = scmp.eq.s32.totalorder %s33, 0
      %p226 = por %p224, %p225
      %p227 = scmp.ne.s32.totalorder %s219, %s221
      %p228 = scmp.eq.s32.totalorder %s38, 1
      %p229 = por %p227, %p228
      %p230 = scmp.ne.s32.totalorder %s221, %s222
      %p231 = scmp.eq.s32.totalorder %s38, 0
      %p232 = por %p230, %p231
      %p233 = scmp.ne.s32.totalorder %s221, %s222
      %p234 = scmp.eq.s32.totalorder %s39, 1
      %p235 = por %p233, %p234
      %p237 = scmp.ne.s32.totalorder %s222, %s236
      %p238 = scmp.eq.s32.totalorder %s39, 0
      %p239 = por %p237, %p238
      %s241 = sadd.s32 %s240, 1
      %p244 = scmp.eq.s32.totalorder %s33, 1
      %p245 = scmp.ne.s32.totalorder %s240, %s242
      %p246 = scmp.eq.s32.totalorder %s33, 0
      %p247 = por %p245, %p246
      %p248 = scmp.ne.s32.totalorder %s240, %s242
      %p249 = scmp.eq.s32.totalorder %s38, 1
      %p250 = por %p248, %p249
      %p251 = scmp.ne.s32.totalorder %s242, %s243
      %p252 = scmp.eq.s32.totalorder %s38, 0
      %p253 = por %p251, %p252
      %p254 = scmp.ne.s32.totalorder %s242, %s243
      %p255 = scmp.eq.s32.totalorder %s39, 1
      %p256 = por %p254, %p255
      %p258 = scmp.ne.s32.totalorder %s243, %s257
      %p259 = scmp.eq.s32.totalorder %s39, 0
      %p260 = por %p258, %p259
      %s262 = sadd.s32 %s261, 1
      %p265 = scmp.eq.s32.totalorder %s33, 1
      %p266 = scmp.ne.s32.totalorder %s261, %s263
      %p267 = scmp.eq.s32.totalorder %s33, 0
      %p268 = por %p266, %p267
      %p269 = scmp.ne.s32.totalorder %s261, %s263
      %p270 = scmp.eq.s32.totalorder %s38, 1
      %p271 = por %p269, %p270
      %p272 = scmp.ne.s32.totalorder %s263, %s264
      %p273 = scmp.eq.s32.totalorder %s38, 0
      %p274 = por %p272, %p273
      %p275 = scmp.ne.s32.totalorder %s263, %s264
      %p276 = scmp.eq.s32.totalorder %s39, 1
      %p277 = por %p275, %p276
      %p279 = scmp.ne.s32.totalorder %s264, %s278
      %p280 = scmp.eq.s32.totalorder %s39, 0
      %p281 = por %p279, %p280
      %s283 = sadd.s32 %s282, 1
      %p286 = scmp.eq.s32.totalorder %s33, 1
      %p287 = scmp.ne.s32.totalorder %s282, %s284
      %p288 = scmp.eq.s32.totalorder %s33, 0
      %p289 = por %p287, %p288
      %p290 = scmp.ne.s32.totalorder %s282, %s284
      %p291 = scmp.eq.s32.totalorder %s38, 1
      %p292 = por %p290, %p291
      %p293 = scmp.ne.s32.totalorder %s284, %s285
      %p294 = scmp.eq.s32.totalorder %s38, 0
      %p295 = por %p293, %p294
      %p296 = scmp.ne.s32.totalorder %s284, %s285
      %p297 = scmp.eq.s32.totalorder %s39, 1
      %p298 = por %p296, %p297
      %p300 = scmp.ne.s32.totalorder %s285, %s299
      %p301 = scmp.eq.s32.totalorder %s39, 0
      %p302 = por %p300, %p301
      %s304 = sadd.s32 %s303, 1
      %p307 = scmp.eq.s32.totalorder %s33, 1
      %p308 = scmp.ne.s32.totalorder %s303, %s305
      %p309 = scmp.eq.s32.totalorder %s33, 0
      %p310 = por %p308, %p309
      %p311 = scmp.ne.s32.totalorder %s303, %s305
      %p312 = scmp.eq.s32.totalorder %s38, 1
      %p313 = por %p311, %p312
      %p314 = scmp.ne.s32.totalorder %s305, %s306
      %p315 = scmp.eq.s32.totalorder %s38, 0
      %p316 = por %p314, %p315
      %p317 = scmp.ne.s32.totalorder %s305, %s306
      %p318 = scmp.eq.s32.totalorder %s39, 1
      %p319 = por %p317, %p318
      %p321 = scmp.ne.s32.totalorder %s306, %s320
      %p322 = scmp.eq.s32.totalorder %s39, 0
      %p323 = por %p321, %p322
      %s325 = sadd.s32 %s324, 1
      %p328 = scmp.eq.s32.totalorder %s33, 1
      %p329 = scmp.ne.s32.totalorder %s324, %s326
      %p330 = scmp.eq.s32.totalorder %s33, 0
      %p331 = por %p329, %p330
      %p332 = scmp.ne.s32.totalorder %s324, %s326
      %p333 = scmp.eq.s32.totalorder %s38, 1
      %p334 = por %p332, %p333
      %p335 = scmp.ne.s32.totalorder %s326, %s327
      %p336 = scmp.eq.s32.totalorder %s38, 0
      %p337 = por %p335, %p336
      %p338 = scmp.ne.s32.totalorder %s326, %s327
      %p339 = scmp.eq.s32.totalorder %s39, 1
      %p340 = por %p338, %p339
      %p342 = scmp.ne.s32.totalorder %s327, %s341
      %p343 = scmp.eq.s32.totalorder %s39, 0
      %p344 = por %p342, %p343
      %s346 = sadd.s32 %s345, 1
      %p349 = scmp.eq.s32.totalorder %s33, 1
      %p350 = scmp.ne.s32.totalorder %s345, %s347
      %p351 = scmp.eq.s32.totalorder %s33, 0
      %p352 = por %p350, %p351
      %p353 = scmp.ne.s32.totalorder %s345, %s347
      %p354 = scmp.eq.s32.totalorder %s38, 1
      %p355 = por %p353, %p354
      %p356 = scmp.ne.s32.totalorder %s347, %s348
      %p357 = scmp.eq.s32.totalorder %s38, 0
      %p358 = por %p356, %p357
      %p359 = scmp.ne.s32.totalorder %s347, %s348
      %p360 = scmp.eq.s32.totalorder %s39, 1
      %p361 = por %p359, %p360
      %p363 = scmp.ne.s32.totalorder %s348, %s362
      %p364 = scmp.eq.s32.totalorder %s39, 0
      %p365 = por %p363, %p364
      %s367 = sadd.s32 %s366, 1
      %p370 = scmp.eq.s32.totalorder %s33, 1
      %p371 = scmp.ne.s32.totalorder %s366, %s368
      %p372 = scmp.eq.s32.totalorder %s33, 0
      %p373 = por %p371, %p372
      %p374 = scmp.ne.s32.totalorder %s366, %s368
      %p375 = scmp.eq.s32.totalorder %s38, 1
      %p376 = por %p374, %p375
      %p377 = scmp.ne.s32.totalorder %s368, %s369
      %p378 = scmp.eq.s32.totalorder %s38, 0
      %p379 = por %p377, %p378
      %p380 = scmp.ne.s32.totalorder %s368, %s369
      %p381 = scmp.eq.s32.totalorder %s39, 1
      %p382 = por %p380, %p381
      %p384 = scmp.ne.s32.totalorder %s369, %s383
      %p385 = scmp.eq.s32.totalorder %s39, 0
      %p386 = por %p384, %p385
      %s388 = sadd.s32 %s387, 1
      %p391 = scmp.eq.s32.totalorder %s33, 1
      %p392 = scmp.ne.s32.totalorder %s387, %s389
      %p393 = scmp.eq.s32.totalorder %s33, 0
      %p394 = por %p392, %p393
      %p395 = scmp.ne.s32.totalorder %s387, %s389
      %p396 = scmp.eq.s32.totalorder %s38, 1
      %p397 = por %p395, %p396
      %p398 = scmp.ne.s32.totalorder %s389, %s390
      %p399 = scmp.eq.s32.totalorder %s38, 0
      %p400 = por %p398, %p399
      %p401 = scmp.ne.s32.totalorder %s389, %s390
      %p402 = scmp.eq.s32.totalorder %s39, 1
      %p403 = por %p401, %p402
      %p405 = scmp.ne.s32.totalorder %s390, %s404
      %p406 = scmp.eq.s32.totalorder %s39, 0
      %p407 = por %p405, %p406
      %s409 = sadd.s32 %s408, 1
      %p412 = scmp.eq.s32.totalorder %s33, 1
      %p413 = scmp.ne.s32.totalorder %s408, %s410
      %p414 = scmp.eq.s32.totalorder %s33, 0
      %p415 = por %p413, %p414
      %p416 = scmp.ne.s32.totalorder %s408, %s410
      %p417 = scmp.eq.s32.totalorder %s38, 1
      %p418 = por %p416, %p417
      %p419 = scmp.ne.s32.totalorder %s410, %s411
      %p420 = scmp.eq.s32.totalorder %s38, 0
      %p421 = por %p419, %p420
      %p422 = scmp.ne.s32.totalorder %s410, %s411
      %p423 = scmp.eq.s32.totalorder %s39, 1
      %p424 = por %p422, %p423
      %p426 = scmp.ne.s32.totalorder %s411, %s425
      %p427 = scmp.eq.s32.totalorder %s39, 0
      %p428 = por %p426, %p427
      %s430 = sadd.s32 %s429, 1
      %p433 = scmp.eq.s32.totalorder %s33, 1
      %p434 = scmp.ne.s32.totalorder %s429, %s431
      %p435 = scmp.eq.s32.totalorder %s33, 0
      %p436 = por %p434, %p435
      %p437 = scmp.ne.s32.totalorder %s429, %s431
      %p438 = scmp.eq.s32.totalorder %s38, 1
      %p439 = por %p437, %p438
      %p440 = scmp.ne.s32.totalorder %s431, %s432
      %p441 = scmp.eq.s32.totalorder %s38, 0
      %p442 = por %p440, %p441
      %p443 = scmp.ne.s32.totalorder %s431, %s432
      %p444 = scmp.eq.s32.totalorder %s39, 1
      %p445 = por %p443, %p444
      %p447 = scmp.ne.s32.totalorder %s432, %s446
      %p448 = scmp.eq.s32.totalorder %s39, 0
      %p449 = por %p447, %p448
      %s450 = ssub.s32 %s33, %s40
      %p451 = scmp.eq.s32.totalorder %s450, 0
      %s453 = sadd.s32 %s452, 1
      %s454 = scalar_select %p451, %s452, %s453
      %p457 = pneg %p451
      %p458 = scmp.eq.s32.totalorder %s33, 1
      %p459 = por %p457, %p458
      %p460 = scmp.ne.s32.totalorder %s452, %s455
      %p461 = scmp.eq.s32.totalorder %s33, 0
      %p462 = por %p460, %p461
      %p463 = scmp.ne.s32.totalorder %s452, %s455
      %p464 = scmp.eq.s32.totalorder %s38, 1
      %p465 = por %p463, %p464
      %p466 = scmp.ne.s32.totalorder %s455, %s456
      %p467 = scmp.eq.s32.totalorder %s38, 0
      %p468 = por %p466, %p467
      %p469 = scmp.ne.s32.totalorder %s455, %s456
      %p470 = scmp.eq.s32.totalorder %s39, 1
      %p471 = por %p469, %p470
      %p473 = scmp.ne.s32.totalorder %s456, %s472
      %p474 = scmp.eq.s32.totalorder %s39, 0
      %p475 = por %p473, %p474
      %p476 = scmp.le.s32.totalorder 1, %s33
      %p477 = scmp.lt.s32.totalorder %s33, 3
      %p478 = pnand %p476, %p477
      %p479 = pneg %p478
      // Predicated region
      $region9: #{tpu_custom_call.1} parent=5 // pred_check
        _
      $region10: #{tpu_custom_call.1} parent=5 // pred_check_branch
        %481 = sbr.rel (%p478) target = $region12
      $region11: #{tpu_custom_call.1} parent=5 // pred_region
        %s482 = ssub.s32 %s33, 1
        // Predicated region
        $region13: #{tpu_custom_call.1} parent=11 // pred_check
          %p483 = pneg %p106
        $region14: #{tpu_custom_call.1} parent=11 // pred_check_branch
          %485 = sbr.rel (%p483) target = $region16
        $region15: #{tpu_custom_call.1} parent=11 // pred_region
          %s487 = ssub.s32 64, 64
          %488 = vsyncadd [#allocation6], %s487
          %s490 = sshll.u32 [#allocation5], 4
          %s491 = int_to_ptr.vmem [resolvable:$true] %s490
          %493 = dma.hbm_to_vmem [thread:$0]  %s2, 64, %s491, [#allocation6]
        $region16: #{tpu_custom_call.1} parent=11 // pred_fallthru
          _
        // Predicated region
        $region17: #{tpu_custom_call.1} parent=11 // pred_check
          %p494 = pneg %p127
        $region18: #{tpu_custom_call.1} parent=11 // pred_check_branch
          %496 = sbr.rel (%p494) target = $region20
        $region19: #{tpu_custom_call.1} parent=11 // pred_region
          _
        $region20: #{tpu_custom_call.1} parent=11 // pred_fallthru
          _
        // Predicated region
        $region21: #{tpu_custom_call.1} parent=11 // pred_check
          %p497 = pneg %p148
        $region22: #{tpu_custom_call.1} parent=11 // pred_check_branch
          %499 = sbr.rel (%p497) target = $region24
        $region23: #{tpu_custom_call.1} parent=11 // pred_region
          _
        $region24: #{tpu_custom_call.1} parent=11 // pred_fallthru
          _
        // Predicated region
        $region25: #{tpu_custom_call.1} parent=11 // pred_check
          %p500 = pneg %p169
        $region26: #{tpu_custom_call.1} parent=11 // pred_check_branch
          %502 = sbr.rel (%p500) target = $region28
        $region27: #{tpu_custom_call.1} parent=11 // pred_region
          _
        $region28: #{tpu_custom_call.1} parent=11 // pred_fallthru
          _
        // Predicated region
        $region29: #{tpu_custom_call.1} parent=11 // pred_check
          %p503 = pneg %p190
        $region30: #{tpu_custom_call.1} parent=11 // pred_check_branch
          %505 = sbr.rel (%p503) target = $region32
        $region31: #{tpu_custom_call.1} parent=11 // pred_region
          _
        $region32: #{tpu_custom_call.1} parent=11 // pred_fallthru
          _
        // Predicated region
        $region33: #{tpu_custom_call.1} parent=11 // pred_check
          %p506 = pneg %p211
        $region34: #{tpu_custom_call.1} parent=11 // pred_check_branch
          %508 = sbr.rel (%p506) target = $region36
        $region35: #{tpu_custom_call.1} parent=11 // pred_region
          %s510 = ssub.s32 256, 256
          %511 = vsyncadd [#allocation6], %s510
          %s512 = sshll.u32 [#allocation7], 4
          %s513 = int_to_ptr.vmem [resolvable:$true] %s512
          %518 = dma.hbm_to_vmem [thread:$0]  %s7, 256, %s513, [#allocation6], 64, 64, 4
        $region36: #{tpu_custom_call.1} parent=11 // pred_fallthru
          _
        // Predicated region
        $region37: #{tpu_custom_call.1} parent=11 // pred_check
          %p519 = pneg %p232
        $region38: #{tpu_custom_call.1} parent=11 // pred_check_branch
          %521 = sbr.rel (%p519) target = $region40
        $region39: #{tpu_custom_call.1} parent=11 // pred_region
          _
        $region40: #{tpu_custom_call.1} parent=11 // pred_fallthru
          _
        // Predicated region
        $region41: #{tpu_custom_call.1} parent=11 // pred_check
          %p522 = pneg %p253
        $region42: #{tpu_custom_call.1} parent=11 // pred_check_branch
          %524 = sbr.rel (%p522) target = $region44
        $region43: #{tpu_custom_call.1} parent=11 // pred_region
          %s526 = ssub.s32 256, 256
          %527 = vsyncadd [#allocation9], %s526
          %s528 = sshll.u32 [#allocation8], 4
          %s529 = int_to_ptr.vmem [resolvable:$true] %s528
          %534 = dma.hbm_to_vmem [thread:$0]  %s9, 256, %s529, [#allocation9], 64, 64, 4
        $region44: #{tpu_custom_call.1} parent=11 // pred_fallthru
          _
        // Predicated region
        $region45: #{tpu_custom_call.1} parent=11 // pred_check
          %p535 = pneg %p274
        $region46: #{tpu_custom_call.1} parent=11 // pred_check_branch
          %537 = sbr.rel (%p535) target = $region48
        $region47: #{tpu_custom_call.1} parent=11 // pred_region
          _
        $region48: #{tpu_custom_call.1} parent=11 // pred_fallthru
          _
        // Predicated region
        $region49: #{tpu_custom_call.1} parent=11 // pred_check
          %p538 = pneg %p295
        $region50: #{tpu_custom_call.1} parent=11 // pred_check_branch
          %540 = sbr.rel (%p538) target = $region52
        $region51: #{tpu_custom_call.1} parent=11 // pred_region
          _
        $region52: #{tpu_custom_call.1} parent=11 // pred_fallthru
          _
        // Predicated region
        $region53: #{tpu_custom_call.1} parent=11 // pred_check
          %p541 = pneg %p316
        $region54: #{tpu_custom_call.1} parent=11 // pred_check_branch
          %543 = sbr.rel (%p541) target = $region56
        $region55: #{tpu_custom_call.1} parent=11 // pred_region
          _
        $region56: #{tpu_custom_call.1} parent=11 // pred_fallthru
          _
        // Predicated region
        $region57: #{tpu_custom_call.1} parent=11 // pred_check
          %p544 = pneg %p337
        $region58: #{tpu_custom_call.1} parent=11 // pred_check_branch
          %546 = sbr.rel (%p544) target = $region60
        $region59: #{tpu_custom_call.1} parent=11 // pred_region
          %s548 = ssub.s32 256, 256
          %549 = vsyncadd [#allocation9], %s548
          %s550 = sshll.u32 [#allocation10], 4
          %s551 = int_to_ptr.vmem [resolvable:$true] %s550
          %556 = dma.hbm_to_vmem [thread:$0]  %s13, 256, %s551, [#allocation9], 64, 64, 4
        $region60: #{tpu_custom_call.1} parent=11 // pred_fallthru
          _
        // Predicated region
        $region61: #{tpu_custom_call.1} parent=11 // pred_check
          %p557 = pneg %p358
        $region62: #{tpu_custom_call.1} parent=11 // pred_check_branch
          %559 = sbr.rel (%p557) target = $region64
        $region63: #{tpu_custom_call.1} parent=11 // pred_region
          _
        $region64: #{tpu_custom_call.1} parent=11 // pred_fallthru
          _
        // Predicated region
        $region65: #{tpu_custom_call.1} parent=11 // pred_check
          %p560 = pneg %p379
        $region66: #{tpu_custom_call.1} parent=11 // pred_check_branch
          %562 = sbr.rel (%p560) target = $region68
        $region67: #{tpu_custom_call.1} parent=11 // pred_region
          _
        $region68: #{tpu_custom_call.1} parent=11 // pred_fallthru
          _
        // Predicated region
        $region69: #{tpu_custom_call.1} parent=11 // pred_check
          %p563 = pneg %p400
        $region70: #{tpu_custom_call.1} parent=11 // pred_check_branch
          %565 = sbr.rel (%p563) target = $region72
        $region71: #{tpu_custom_call.1} parent=11 // pred_region
          _
        $region72: #{tpu_custom_call.1} parent=11 // pred_fallthru
          _
        // Predicated region
        $region73: #{tpu_custom_call.1} parent=11 // pred_check
          %p566 = pneg %p421
        $region74: #{tpu_custom_call.1} parent=11 // pred_check_branch
          %568 = sbr.rel (%p566) target = $region76
        $region75: #{tpu_custom_call.1} parent=11 // pred_region
          _
        $region76: #{tpu_custom_call.1} parent=11 // pred_fallthru
          _
        // Predicated region
        $region77: #{tpu_custom_call.1} parent=11 // pred_check
          %p569 = pneg %p442
        $region78: #{tpu_custom_call.1} parent=11 // pred_check_branch
          %571 = sbr.rel (%p569) target = $region80
        $region79: #{tpu_custom_call.1} parent=11 // pred_region
          _
        $region80: #{tpu_custom_call.1} parent=11 // pred_fallthru
          _
      $region12: #{tpu_custom_call.1} parent=5 // pred_fallthru
        _
      %p572 = scmp.lt.s32.totalorder %s33, 2
      // Predicated region
      $region81: #{tpu_custom_call.1} parent=5 // pred_check
        %p573 = pneg %p572
      $region82: #{tpu_custom_call.1} parent=5 // pred_check_branch
        %575 = sbr.rel (%p573) target = $region84
      $region83: #{tpu_custom_call.1} parent=5 // pred_region
        // Predicated region
        $region85: #{tpu_custom_call.1} parent=83 // pred_check
          %p576 = pneg %p53
        $region86: #{tpu_custom_call.1} parent=83 // pred_check_branch
          %578 = sbr.rel (%p576) target = $region88
        $region87: #{tpu_custom_call.1} parent=83 // pred_region
          %p579 = scmp.lt.s32.totalorder %s33, 1
          %s580 = scalar_select %p579, %s33, 1
          %s581 = smul.addr %s580, 8
          %s582 = scalar_lea.vmem %s0, %s581
        $region88: #{tpu_custom_call.1} parent=83 // pred_fallthru
          _
        // Predicated region
        $region89: #{tpu_custom_call.1} parent=83 // pred_check
          %p583 = pneg %p79
        $region90: #{tpu_custom_call.1} parent=83 // pred_check_branch
          %585 = sbr.rel (%p583) target = $region92
        $region91: #{tpu_custom_call.1} parent=83 // pred_region
          %s586 = sand.u32 %s69, 1
          %s587 = scalar_lea.sflag [#allocation3], %s586
          %s588 = sand.u32 %s69, 1
          %s589 = smul.addr %s588, 4
          %s590 = scalar_lea.vmem [#allocation2], %s589
          %s592 = ssub.s32 64, 64
          %593 = vsyncadd %s587, %s592
          %s594 = smul.addr %s33, 64
          %s595 = scalar_lea.hbm %s1, %s594
          %s597 = sshll.u32 %s590, 4
          %s598 = int_to_ptr.vmem [resolvable:$true] %s597
          %600 = dma.hbm_to_vmem [thread:$0]  %s595, 64, %s598, %s587
        $region92: #{tpu_custom_call.1} parent=83 // pred_fallthru
          _
      $region84: #{tpu_custom_call.1} parent=5 // pred_fallthru
        _
      %p601 = scmp.le.s32.totalorder 1, %s33
      %p602 = scmp.lt.s32.totalorder %s33, 3
      %p603 = pnand %p601, %p602
      %p604 = pneg %p603
      // Predicated region
      $region93: #{tpu_custom_call.1} parent=5 // pred_check
        _
      $region94: #{tpu_custom_call.1} parent=5 // pred_check_branch
        %606 = sbr.rel (%p603) target = $region96
      $region95: #{tpu_custom_call.1} parent=5 // pred_region
        %s607 = ssub.s32 %s33, 1
        %s608 = sand.u32 %s72, 1
        %s609 = scalar_lea.sflag [#allocation3], %s608
        %s610 = sand.u32 %s72, 1
        %s611 = smul.addr %s610, 4
        %s612 = scalar_lea.vmem [#allocation2], %s611
        // Predicated region
        $region97: #{tpu_custom_call.1} parent=95 // pred_check
          %p613 = pneg %p85
        $region98: #{tpu_custom_call.1} parent=95 // pred_check_branch
          %615 = sbr.rel (%p613) target = $region100
        $region99: #{tpu_custom_call.1} parent=95 // pred_region
          %616 = dma.done %s609, 64
        $region100: #{tpu_custom_call.1} parent=95 // pred_fallthru
          _
        // Predicated region
        $region101: #{tpu_custom_call.1} parent=95 // pred_check
          %p617 = pneg %p106
        $region102: #{tpu_custom_call.1} parent=95 // pred_check_branch
          %619 = sbr.rel (%p617) target = $region104
        $region103: #{tpu_custom_call.1} parent=95 // pred_region
          %620 = dma.done [#allocation6], 64
        $region104: #{tpu_custom_call.1} parent=95 // pred_fallthru
          _
        // Predicated region
        $region105: #{tpu_custom_call.1} parent=95 // pred_check
          %p621 = pneg %p211
        $region106: #{tpu_custom_call.1} parent=95 // pred_check_branch
          %623 = sbr.rel (%p621) target = $region108
        $region107: #{tpu_custom_call.1} parent=95 // pred_region
          %624 = dma.done [#allocation6], 256
        $region108: #{tpu_custom_call.1} parent=95 // pred_fallthru
          _
        // Predicated region
        $region109: #{tpu_custom_call.1} parent=95 // pred_check
          %p625 = pneg %p253
        $region110: #{tpu_custom_call.1} parent=95 // pred_check_branch
          %627 = sbr.rel (%p625) target = $region112
        $region111: #{tpu_custom_call.1} parent=95 // pred_region
          %628 = dma.done [#allocation9], 256
        $region112: #{tpu_custom_call.1} parent=95 // pred_fallthru
          _
        // Predicated region
        $region113: #{tpu_custom_call.1} parent=95 // pred_check
          %p629 = pneg %p337
        $region114: #{tpu_custom_call.1} parent=95 // pred_check_branch
          %631 = sbr.rel (%p629) target = $region116
        $region115: #{tpu_custom_call.1} parent=95 // pred_region
          %632 = dma.done [#allocation9], 256
        $region116: #{tpu_custom_call.1} parent=95 // pred_fallthru
          _
        %p633 = scmp.lt.s32.totalorder %s38, 1
        %s634 = scalar_select %p633, %s38, 1
        %s635 = smul.addr %s634, 8
        %s636 = scalar_lea.vmem %s0, %s635
        %p637 = pneg %p59
        %p638 = pneg %p56
        %s639 = sand.u32 %s72, 1
        %s640 = scalar_lea.sflag [#allocation3], %s639
        %s641 = sand.u32 %s72, 1
        %s642 = smul.addr %s641, 4
        %s643 = scalar_lea.vmem [#allocation2], %s642
        %p644 = pneg %p85
        %p645 = pneg %p82
        %p646 = pneg %p106
        %p647 = pneg %p103
        %p648 = pneg %p127
        %p649 = pneg %p124
        %p650 = pneg %p148
        %p651 = pneg %p145
        %p652 = pneg %p169
        %p653 = pneg %p166
        %p654 = pneg %p190
        %p655 = pneg %p187
        %p656 = pneg %p211
        %p657 = pneg %p208
        %p658 = pneg %p232
        %p659 = pneg %p229
        %p660 = pneg %p253
        %p661 = pneg %p250
        %p662 = pneg %p274
        %p663 = pneg %p271
        %p664 = pneg %p295
        %p665 = pneg %p292
        %p666 = pneg %p316
        %p667 = pneg %p313
        %p668 = pneg %p337
        %p669 = pneg %p334
        %p670 = pneg %p358
        %p671 = pneg %p355
        %p672 = pneg %p379
        %p673 = pneg %p376
        %p674 = pneg %p400
        %p675 = pneg %p397
        %p676 = pneg %p421
        %p677 = pneg %p418
        %p678 = pneg %p442
        %p679 = pneg %p439
        %p680 = pneg %p468
        %p681 = pneg %p465
        %s682 = sand.u32 %s455, 1
        %s683 = scalar_lea.sflag [#allocation4], %s682
        %s684 = sand.u32 %s455, 1
        %s685 = smul.addr %s684, 8
        %s686 = scalar_lea.vmem [#allocation11], %s685
        %p687 = scmp.lt.s32.totalorder %s38, 1
        %s688 = scalar_select %p687, %s38, 1
        %s689 = smul.addr %s688, 8
        %s690 = scalar_lea.vmem %s0, %s689
        %v694 = vld [vmem:[%s690] sm:$0xff]
        %v695 = vpack.c.bf16 %v694, %v694
        %v696 = vld [vmem:[%s3] sm:$0xf]
        %v697 = vld [vmem:[%s3 + $0x4] sm:$0xf]
        %v698 = vld [vmem:[%s3 + $0x8] sm:$0xf]
        %v699 = vld [vmem:[%s3 + $0xc] sm:$0xf]
        %v700 = vld [vmem:[%s4] sm:$0x1]
        %v702 = vlaneseq
        %v703 = vshrl.u32 %v702, 7
        %v704 = vsub.s32 0, %v703
        %v705 = vrot.slane %v700, %v704
        %v711 = vunpack.c.l.b16 %v696
        %v712 = vunpack.c.l.b16 %v697
        %v713 = vunpack.c.l.b16 %v698
        %v714 = vunpack.c.l.b16 %v699
        %v715 = vpack.c.b16 %v712, %v711
        %v716 = vpack.c.b16 %v714, %v713
        %vm719 = vcmask 261120
        %v721 = vsel %vm719, %v695, 0
        %723 = vmatprep.subr.bf16.mxu0 0
        %724 = vmatpush1.bf16.msra.mxu0 0
        %725 = vmatprep.subr.bf16.mxu0 0
        %726 = vmatpush1.bf16.msra.mxu0 0
        %727 = vmatprep.subr.bf16.mxu0 0
        %728 = vmatpush1.bf16.msra.mxu0 0
        %729 = vmatprep.subr.bf16.mxu0 0
        %730 = vmatpush1.bf16.msra.mxu0 0
        %731 = vmatprep.subr.bf16.mxu0 0
        %732 = vmatpush1.bf16.msra.mxu0 0
        %733 = vmatprep.subr.bf16.mxu0 0
        %734 = vmatpush1.bf16.msra.mxu0 0
        %735 = vmatprep.subr.bf16.mxu0 0
        %736 = vmatpush1.bf16.msra.mxu0 %v716
        %737 = vmatprep.subr.bf16.mxu0 0
        %738 = vmatpush1.bf16.msra.mxu0 %v715
        %739 = vmatprep.subr.bf16.mxu0 0
        %740 = vmatpush2.bf16.msra.mxu0 0
        %741 = vmatprep.subr.bf16.mxu0 0
        %742 = vmatpush2.bf16.msra.mxu0 0
        %743 = vmatprep.subr.bf16.mxu0 0
        %744 = vmatpush2.bf16.msra.mxu0 0
        %745 = vmatprep.subr.bf16.mxu0 0
        %746 = vmatpush2.bf16.msra.mxu0 0
        %747 = vmatprep.subr.bf16.mxu0 0
        %748 = vmatpush2.bf16.msra.mxu0 0
        %749 = vmatprep.subr.bf16.mxu0 0
        %750 = vmatpush2.bf16.msra.mxu0 0
        %751 = vmatprep.subr.bf16.mxu0 0
        %752 = vmatpush2.bf16.msra.mxu0 0
        %753 = vmatprep.subr.bf16.mxu0 0
        %754 = vmatpush2.bf16.msra.mxu0 0
        %755 = vmatprep.mubr.bf16.mxu0 0
        %756 = vmatmul.mubr.bf16.gmra.mxu0 %v721
        %v757 = vpop.f32.mrf.mxu0
        %v758 = vadd.f32 %v705, %v757
        %v759 = vpop.f32.mrf.mxu0
        %v760 = vpop.f32.mrf.mxu0
        %v761 = vpop.f32.mrf.mxu0
        %762 = vdwg.mxu0
        %v763 = vmul.f32 %v758, 0.35355338
        %v764 = vld [vmem:[%s5] sm:$0xf]
        %v765 = vld [vmem:[%s5 + $0x4] sm:$0xf]
        %v766 = vld [vmem:[%s5 + $0x8] sm:$0xf]
        %v767 = vld [vmem:[%s5 + $0xc] sm:$0xf]
        %v768 = vld [vmem:[%s6] sm:$0x1]
        %v770 = vlaneseq
        %v771 = vshrl.u32 %v770, 7
        %v772 = vsub.s32 0, %v771
        %v773 = vrot.slane %v768, %v772
        %v779 = vunpack.c.l.b16 %v764
        %v780 = vunpack.c.l.b16 %v765
        %v781 = vunpack.c.l.b16 %v766
        %v782 = vunpack.c.l.b16 %v767
        %v783 = vpack.c.b16 %v780, %v779
        %v784 = vpack.c.b16 %v782, %v781
        %787 = vmatprep.subr.bf16.mxu0 0
        %788 = vmatpush1.bf16.msra.mxu0 0
        %789 = vmatprep.subr.bf16.mxu0 0
        %790 = vmatpush1.bf16.msra.mxu0 0
        %791 = vmatprep.subr.bf16.mxu0 0
        %792 = vmatpush1.bf16.msra.mxu0 0
        %793 = vmatprep.subr.bf16.mxu0 0
        %794 = vmatpush1.bf16.msra.mxu0 0
        %795 = vmatprep.subr.bf16.mxu0 0
        %796 = vmatpush1.bf16.msra.mxu0 0
        %797 = vmatprep.subr.bf16.mxu0 0
        %798 = vmatpush1.bf16.msra.mxu0 0
        %799 = vmatprep.subr.bf16.mxu0 0
        %800 = vmatpush1.bf16.msra.mxu0 %v784
        %801 = vmatprep.subr.bf16.mxu0 0
        %802 = vmatpush1.bf16.msra.mxu0 %v783
        %803 = vmatprep.subr.bf16.mxu0 0
        %804 = vmatpush2.bf16.msra.mxu0 0
        %805 = vmatprep.subr.bf16.mxu0 0
        %806 = vmatpush2.bf16.msra.mxu0 0
        %807 = vmatprep.subr.bf16.mxu0 0
        %808 = vmatpush2.bf16.msra.mxu0 0
        %809 = vmatprep.subr.bf16.mxu0 0
        %810 = vmatpush2.bf16.msra.mxu0 0
        %811 = vmatprep.subr.bf16.mxu0 0
        %812 = vmatpush2.bf16.msra.mxu0 0
        %813 = vmatprep.subr.bf16.mxu0 0
        %814 = vmatpush2.bf16.msra.mxu0 0
        %815 = vmatprep.subr.bf16.mxu0 0
        %816 = vmatpush2.bf16.msra.mxu0 0
        %817 = vmatprep.subr.bf16.mxu0 0
        %818 = vmatpush2.bf16.msra.mxu0 0
        %819 = vmatprep.mubr.bf16.mxu0 0
        %820 = vmatmul.mubr.bf16.gmra.mxu0 %v721
        %v821 = vpop.f32.mrf.mxu0
        %v822 = vadd.f32 %v773, %v821
        %v823 = vpop.f32.mrf.mxu0
        %v824 = vpop.f32.mrf.mxu0
        %v825 = vpop.f32.mrf.mxu0
        %826 = vdwg.mxu0
        %v827 = vld [vmem:[#allocation7] sm:$0xf]
        %v828 = vld [vmem:[#allocation7 + $0x4] sm:$0xf]
        %v829 = vld [vmem:[#allocation7 + $0x8] sm:$0xf]
        %v830 = vld [vmem:[#allocation7 + $0xc] sm:$0xf]
        %v831 = vld [vmem:[%s8] sm:$0x1]
        %v833 = vlaneseq
        %v834 = vshrl.u32 %v833, 7
        %v835 = vsub.s32 0, %v834
        %v836 = vrot.slane %v831, %v835
        %v842 = vunpack.c.l.b16 %v827
        %v843 = vunpack.c.l.b16 %v828
        %v844 = vunpack.c.l.b16 %v829
        %v845 = vunpack.c.l.b16 %v830
        %v846 = vpack.c.b16 %v843, %v842
        %v847 = vpack.c.b16 %v845, %v844
        %850 = vmatprep.subr.bf16.mxu0 0
        %851 = vmatpush1.bf16.msra.mxu0 0
        %852 = vmatprep.subr.bf16.mxu0 0
        %853 = vmatpush1.bf16.msra.mxu0 0
        %854 = vmatprep.subr.bf16.mxu0 0
        %855 = vmatpush1.bf16.msra.mxu0 0
        %856 = vmatprep.subr.bf16.mxu0 0
        %857 = vmatpush1.bf16.msra.mxu0 0
        %858 = vmatprep.subr.bf16.mxu0 0
        %859 = vmatpush1.bf16.msra.mxu0 0
        %860 = vmatprep.subr.bf16.mxu0 0
        %861 = vmatpush1.bf16.msra.mxu0 0
        %862 = vmatprep.subr.bf16.mxu0 0
        %863 = vmatpush1.bf16.msra.mxu0 %v847
        %864 = vmatprep.subr.bf16.mxu0 0
        %865 = vmatpush1.bf16.msra.mxu0 %v846
        %866 = vmatprep.subr.bf16.mxu0 0
        %867 = vmatpush2.bf16.msra.mxu0 0
        %868 = vmatprep.subr.bf16.mxu0 0
        %869 = vmatpush2.bf16.msra.mxu0 0
        %870 = vmatprep.subr.bf16.mxu0 0
        %871 = vmatpush2.bf16.msra.mxu0 0
        %872 = vmatprep.subr.bf16.mxu0 0
        %873 = vmatpush2.bf16.msra.mxu0 0
        %874 = vmatprep.subr.bf16.mxu0 0
        %875 = vmatpush2.bf16.msra.mxu0 0
        %876 = vmatprep.subr.bf16.mxu0 0
        %877 = vmatpush2.bf16.msra.mxu0 0
        %878 = vmatprep.subr.bf16.mxu0 0
        %879 = vmatpush2.bf16.msra.mxu0 0
        %880 = vmatprep.subr.bf16.mxu0 0
        %881 = vmatpush2.bf16.msra.mxu0 0
        %882 = vmatprep.mubr.bf16.mxu0 0
        %883 = vmatmul.mubr.bf16.gmra.mxu0 %v721
        %v884 = vpop.f32.mrf.mxu0
        %v885 = vadd.f32 %v836, %v884
        %v886 = vpop.f32.mrf.mxu0
        %v887 = vpop.f32.mrf.mxu0
        %v888 = vpop.f32.mrf.mxu0
        %889 = vdwg.mxu0
        %v890 = vpack.c.bf16 %v763, %v763
        %v891 = vpack.c.bf16 %v822, %v822
        %v892 = vpack.c.bf16 %v885, %v885
        %v893 = vld [vmem:[%s612] sm:$0xf]
        %vm894 = vcmp.gt.bf16.partialorder %v893, 0
        %v895 = vld [vmem:[#allocation5] sm:$0xf]
        %vm896 = vcmask 64512
        %v898 = vsel %vm896, %v890, 0
        %vm900 = vcmask 1043456
        %v902 = vsel %vm900, %v895, 0
        %904 = vmatprep.subr.bf16.mxu0 0
        %905 = vmatpush1.bf16.msra.mxu0 0
        %906 = vmatprep.subr.bf16.mxu0 0
        %907 = vmatpush1.bf16.msra.mxu0 0
        %908 = vmatprep.subr.bf16.mxu0 0
        %909 = vmatpush1.bf16.msra.mxu0 0
        %910 = vmatprep.subr.bf16.mxu0 0
        %911 = vmatpush1.bf16.msra.mxu0 0
        %912 = vmatprep.subr.bf16.mxu0 0
        %913 = vmatpush1.bf16.msra.mxu0 0
        %914 = vmatprep.subr.bf16.mxu0 0
        %915 = vmatpush1.bf16.msra.mxu0 0
        %916 = vmatprep.subr.bf16.mxu0 0
        %917 = vmatpush1.bf16.msra.mxu0 0
        %918 = vmatprep.subr.bf16.mxu0 0
        %919 = vmatpush1.bf16.msra.mxu0 %v902
        %920 = vmatprep.subr.bf16.mxu0 0
        %921 = vmatpush2.bf16.msra.mxu0 0
        %922 = vmatprep.subr.bf16.mxu0 0
        %923 = vmatpush2.bf16.msra.mxu0 0
        %924 = vmatprep.subr.bf16.mxu0 0
        %925 = vmatpush2.bf16.msra.mxu0 0
        %926 = vmatprep.subr.bf16.mxu0 0
        %927 = vmatpush2.bf16.msra.mxu0 0
        %928 = vmatprep.subr.bf16.mxu0 0
        %929 = vmatpush2.bf16.msra.mxu0 0
        %930 = vmatprep.subr.bf16.mxu0 0
        %931 = vmatpush2.bf16.msra.mxu0 0
        %932 = vmatprep.subr.bf16.mxu0 0
        %933 = vmatpush2.bf16.msra.mxu0 0
        %934 = vmatprep.subr.bf16.mxu0 0
        %935 = vmatpush2.bf16.msra.mxu0 0
        %936 = vmatprep.mubr.bf16.mxu0 0
        %937 = vmatmul.mubr.bf16.gmra.mxu0 %v898
        %v938 = vpop.f32.mrf.mxu0
        %v939 = vadd.f32 0.0, %v938
        %v940 = vpop.f32.mrf.mxu0
        %v941 = vpop.f32.mrf.mxu0
        %v942 = vpop.f32.mrf.mxu0
        %943 = vdwg.mxu0
        %s945 = sor.u32 256, 121
        %946 = vrot.lane.b32.xlu0 %v939, %s945
        %v947 = vpop.permute.xlu0 %946
        %v949 = vsel %vm896, %v891, 0
        %951 = vmatprep.subr.bf16.mxu0 0
        %952 = vmatpush1.bf16.xpose.msra.mxu0 0
        %953 = vmatprep.subr.bf16.mxu0 0
        %954 = vmatpush1.bf16.xpose.msra.mxu0 0
        %955 = vmatprep.subr.bf16.mxu0 0
        %956 = vmatpush1.bf16.xpose.msra.mxu0 0
        %957 = vmatprep.subr.bf16.mxu0 0
        %958 = vmatpush1.bf16.xpose.msra.mxu0 0
        %959 = vmatprep.subr.bf16.mxu0 0
        %960 = vmatpush1.bf16.xpose.msra.mxu0 0
        %961 = vmatprep.subr.bf16.mxu0 0
        %962 = vmatpush1.bf16.xpose.msra.mxu0 0
        %963 = vmatprep.subr.bf16.mxu0 0
        %964 = vmatpush1.bf16.xpose.msra.mxu0 0
        %965 = vmatprep.subr.bf16.mxu0 0
        %966 = vmatpush1.bf16.xpose.msra.mxu0 %v949
        %967 = vmatprep.subr.bf16.mxu0 0
        %968 = vmatpush2.bf16.xpose.msra.mxu0 0
        %969 = vmatprep.subr.bf16.mxu0 0
        %970 = vmatpush2.bf16.xpose.msra.mxu0 0
        %971 = vmatprep.subr.bf16.mxu0 0
        %972 = vmatpush2.bf16.xpose.msra.mxu0 0
        %973 = vmatprep.subr.bf16.mxu0 0
        %974 = vmatpush2.bf16.xpose.msra.mxu0 0
        %975 = vmatprep.subr.bf16.mxu0 0
        %976 = vmatpush2.bf16.xpose.msra.mxu0 0
        %977 = vmatprep.subr.bf16.mxu0 0
        %978 = vmatpush2.bf16.xpose.msra.mxu0 0
        %979 = vmatprep.subr.bf16.mxu0 0
        %980 = vmatpush2.bf16.xpose.msra.mxu0 0
        %981 = vmatprep.subr.bf16.mxu0 0
        %982 = vmatpush2.bf16.xpose.msra.mxu0 0
        %983 = vmatprep.mubr.bf16.mxu0 0
        %984 = vmatmul.mubr.bf16.gmra.mxu0 %v898
        %v985 = vpop.f32.mrf.mxu0
        %v986 = vadd.f32 %v947, %v985
        %v987 = vpop.f32.mrf.mxu0
        %v988 = vpop.f32.mrf.mxu0
        %v989 = vpop.f32.mrf.mxu0
        %990 = vdwg.mxu0
        %v991 = vsel %vm894, 65537, 0
        %v992 = vunpack.c.l.b16 %v991
        %vm993 = vcmp.ne.s32.totalorder %v992, 0
        %v994 = vsel %vm993, %v986, -1e+09
        %v995 = vsel %vm896, %v994, -inf
        %996 = vmax.xlane.f32.xlu0 %v995
        %v997 = vpop.xlane.xlu0 %996
        %v998 = vsub.f32 %v994, %v997
        %v999 = vmul.f32 %v998, 1.442695
        %v1000 = vpow.pop %v999
        %v1001 = vsel %vm896, %v1000, 0.0
        %1002 = vadd.xlane.f32.xlu0 %v1001
        %v1003 = vpop.xlane.xlu0 %1002
        %v1004 = vrcp.pop %v1003
        %v1005 = vmul.f32 %v1000, %v1004
        %v1006 = vpack.c.bf16 %v1005, %v1005
        %v1008 = vsel %vm896, %v1006, 0
        %v1011 = vsel %vm900, %v892, 0
        %1013 = vmatprep.subr.bf16.mxu0 0
        %1014 = vmatpush1.bf16.msra.mxu0 0
        %1015 = vmatprep.subr.bf16.mxu0 0
        %1016 = vmatpush1.bf16.msra.mxu0 0
        %1017 = vmatprep.subr.bf16.mxu0 0
        %1018 = vmatpush1.bf16.msra.mxu0 0
        %1019 = vmatprep.subr.bf16.mxu0 0
        %1020 = vmatpush1.bf16.msra.mxu0 0
        %1021 = vmatprep.subr.bf16.mxu0 0
        %1022 = vmatpush1.bf16.msra.mxu0 0
        %1023 = vmatprep.subr.bf16.mxu0 0
        %1024 = vmatpush1.bf16.msra.mxu0 0
        %1025 = vmatprep.subr.bf16.mxu0 0
        %1026 = vmatpush1.bf16.msra.mxu0 0
        %1027 = vmatprep.subr.bf16.mxu0 0
        %1028 = vmatpush1.bf16.msra.mxu0 %v1011
        %1029 = vmatprep.subr.bf16.mxu0 0
        %1030 = vmatpush2.bf16.msra.mxu0 0
        %1031 = vmatprep.subr.bf16.mxu0 0
        %1032 = vmatpush2.bf16.msra.mxu0 0
        %1033 = vmatprep.subr.bf16.mxu0 0
        %1034 = vmatpush2.bf16.msra.mxu0 0
        %1035 = vmatprep.subr.bf16.mxu0 0
        %1036 = vmatpush2.bf16.msra.mxu0 0
        %1037 = vmatprep.subr.bf16.mxu0 0
        %1038 = vmatpush2.bf16.msra.mxu0 0
        %1039 = vmatprep.subr.bf16.mxu0 0
        %1040 = vmatpush2.bf16.msra.mxu0 0
        %1041 = vmatprep.subr.bf16.mxu0 0
        %1042 = vmatpush2.bf16.msra.mxu0 0
        %1043 = vmatprep.subr.bf16.mxu0 0
        %1044 = vmatpush2.bf16.msra.mxu0 0
        %1045 = vmatprep.mubr.bf16.mxu0 0
        %1046 = vmatmul.mubr.bf16.gmra.mxu0 %v1008
        %v1047 = vpop.f32.mrf.mxu0
        %v1048 = vadd.f32 0.0, %v1047
        %v1049 = vpop.f32.mrf.mxu0
        %v1050 = vpop.f32.mrf.mxu0
        %v1051 = vpop.f32.mrf.mxu0
        %1052 = vdwg.mxu0
        %1054 = vrot.lane.b32.xlu0 %v890, 120
        %v1055 = vpop.permute.xlu0 %1054
        %v1057 = vsel %vm896, %v1055, 0
        %1059 = vmatprep.subr.bf16.mxu0 0
        %1060 = vmatpush1.bf16.msra.mxu0 0
        %1061 = vmatprep.subr.bf16.mxu0 0
        %1062 = vmatpush1.bf16.msra.mxu0 0
        %1063 = vmatprep.subr.bf16.mxu0 0
        %1064 = vmatpush1.bf16.msra.mxu0 0
        %1065 = vmatprep.subr.bf16.mxu0 0
        %1066 = vmatpush1.bf16.msra.mxu0 0
        %1067 = vmatprep.subr.bf16.mxu0 0
        %1068 = vmatpush1.bf16.msra.mxu0 0
        %1069 = vmatprep.subr.bf16.mxu0 0
        %1070 = vmatpush1.bf16.msra.mxu0 0
        %1071 = vmatprep.subr.bf16.mxu0 0
        %1072 = vmatpush1.bf16.msra.mxu0 0
        %1073 = vmatprep.subr.bf16.mxu0 0
        %1074 = vmatpush1.bf16.msra.mxu0 %v902
        %1075 = vmatprep.subr.bf16.mxu0 0
        %1076 = vmatpush2.bf16.msra.mxu0 0
        %1077 = vmatprep.subr.bf16.mxu0 0
        %1078 = vmatpush2.bf16.msra.mxu0 0
        %1079 = vmatprep.subr.bf16.mxu0 0
        %1080 = vmatpush2.bf16.msra.mxu0 0
        %1081 = vmatprep.subr.bf16.mxu0 0
        %1082 = vmatpush2.bf16.msra.mxu0 0
        %1083 = vmatprep.subr.bf16.mxu0 0
        %1084 = vmatpush2.bf16.msra.mxu0 0
        %1085 = vmatprep.subr.bf16.mxu0 0
        %1086 = vmatpush2.bf16.msra.mxu0 0
        %1087 = vmatprep.subr.bf16.mxu0 0
        %1088 = vmatpush2.bf16.msra.mxu0 0
        %1089 = vmatprep.subr.bf16.mxu0 0
        %1090 = vmatpush2.bf16.msra.mxu0 0
        %1091 = vmatprep.mubr.bf16.mxu0 0
        %1092 = vmatmul.mubr.bf16.gmra.mxu0 %v1057
        %v1093 = vpop.f32.mrf.mxu0
        %v1094 = vadd.f32 0.0, %v1093
        %v1095 = vpop.f32.mrf.mxu0
        %v1096 = vpop.f32.mrf.mxu0
        %v1097 = vpop.f32.mrf.mxu0
        %1098 = vdwg.mxu0
        %s1100 = sor.u32 256, 121
        %1101 = vrot.lane.b32.xlu0 %v1094, %s1100
        %v1102 = vpop.permute.xlu0 %1101
        %1104 = vrot.lane.b32.xlu0 %v891, 120
        %v1105 = vpop.permute.xlu0 %1104
        %v1107 = vsel %vm896, %v1105, 0
        %1109 = vmatprep.subr.bf16.mxu0 0
        %1110 = vmatpush1.bf16.xpose.msra.mxu0 0
        %1111 = vmatprep.subr.bf16.mxu0 0
        %1112 = vmatpush1.bf16.xpose.msra.mxu0 0
        %1113 = vmatprep.subr.bf16.mxu0 0
        %1114 = vmatpush1.bf16.xpose.msra.mxu0 0
        %1115 = vmatprep.subr.bf16.mxu0 0
        %1116 = vmatpush1.bf16.xpose.msra.mxu0 0
        %1117 = vmatprep.subr.bf16.mxu0 0
        %1118 = vmatpush1.bf16.xpose.msra.mxu0 0
        %1119 = vmatprep.subr.bf16.mxu0 0
        %1120 = vmatpush1.bf16.xpose.msra.mxu0 0
        %1121 = vmatprep.subr.bf16.mxu0 0
        %1122 = vmatpush1.bf16.xpose.msra.mxu0 0
        %1123 = vmatprep.subr.bf16.mxu0 0
        %1124 = vmatpush1.bf16.xpose.msra.mxu0 %v1107
        %1125 = vmatprep.subr.bf16.mxu0 0
        %1126 = vmatpush2.bf16.xpose.msra.mxu0 0
        %1127 = vmatprep.subr.bf16.mxu0 0
        %1128 = vmatpush2.bf16.xpose.msra.mxu0 0
        %1129 = vmatprep.subr.bf16.mxu0 0
        %1130 = vmatpush2.bf16.xpose.msra.mxu0 0
        %1131 = vmatprep.subr.bf16.mxu0 0
        %1132 = vmatpush2.bf16.xpose.msra.mxu0 0
        %1133 = vmatprep.subr.bf16.mxu0 0
        %1134 = vmatpush2.bf16.xpose.msra.mxu0 0
        %1135 = vmatprep.subr.bf16.mxu0 0
        %1136 = vmatpush2.bf16.xpose.msra.mxu0 0
        %1137 = vmatprep.subr.bf16.mxu0 0
        %1138 = vmatpush2.bf16.xpose.msra.mxu0 0
        %1139 = vmatprep.subr.bf16.mxu0 0
        %1140 = vmatpush2.bf16.xpose.msra.mxu0 0
        %1141 = vmatprep.mubr.bf16.mxu0 0
        %1142 = vmatmul.mubr.bf16.gmra.mxu0 %v1057
        %v1143 = vpop.f32.mrf.mxu0
        %v1144 = vadd.f32 %v1102, %v1143
        %v1145 = vpop.f32.mrf.mxu0
        %v1146 = vpop.f32.mrf.mxu0
        %v1147 = vpop.f32.mrf.mxu0
        %1148 = vdwg.mxu0
        %v1149 = vsel %vm993, %v1144, -1e+09
        %v1150 = vsel %vm896, %v1149, -inf
        %1151 = vmax.xlane.f32.xlu0 %v1150
        %v1152 = vpop.xlane.xlu0 %1151
        %v1153 = vsub.f32 %v1149, %v1152
        %v1154 = vmul.f32 %v1153, 1.442695
        %v1155 = vpow.pop %v1154
        %v1156 = vsel %vm896, %v1155, 0.0
        %1157 = vadd.xlane.f32.xlu0 %v1156
        %v1158 = vpop.xlane.xlu0 %1157
        %v1159 = vrcp.pop %v1158
        %v1160 = vmul.f32 %v1155, %v1159
        %v1161 = vpack.c.bf16 %v1160, %v1160
        %1163 = vrot.lane.b32.xlu0 %v892, 120
        %v1164 = vpop.permute.xlu0 %1163
        %v1166 = vsel %vm896, %v1161, 0
        %v1169 = vsel %vm900, %v1164, 0
        %1171 = vmatprep.subr.bf16.mxu0 0
        %1172 = vmatpush1.bf16.msra.mxu0 0
        %1173 = vmatprep.subr.bf16.mxu0 0
        %1174 = vmatpush1.bf16.msra.mxu0 0
        %1175 = vmatprep.subr.bf16.mxu0 0
        %1176 = vmatpush1.bf16.msra.mxu0 0
        %1177 = vmatprep.subr.bf16.mxu0 0
        %1178 = vmatpush1.bf16.msra.mxu0 0
        %1179 = vmatprep.subr.bf16.mxu0 0
        %1180 = vmatpush1.bf16.msra.mxu0 0
        %1181 = vmatprep.subr.bf16.mxu0 0
        %1182 = vmatpush1.bf16.msra.mxu0 0
        %1183 = vmatprep.subr.bf16.mxu0 0
        %1184 = vmatpush1.bf16.msra.mxu0 0
        %1185 = vmatprep.subr.bf16.mxu0 0
        %1186 = vmatpush1.bf16.msra.mxu0 %v1169
        %1187 = vmatprep.subr.bf16.mxu0 0
        %1188 = vmatpush2.bf16.msra.mxu0 0
        %1189 = vmatprep.subr.bf16.mxu0 0
        %1190 = vmatpush2.bf16.msra.mxu0 0
        %1191 = vmatprep.subr.bf16.mxu0 0
        %1192 = vmatpush2.bf16.msra.mxu0 0
        %1193 = vmatprep.subr.bf16.mxu0 0
        %1194 = vmatpush2.bf16.msra.mxu0 0
        %1195 = vmatprep.subr.bf16.mxu0 0
        %1196 = vmatpush2.bf16.msra.mxu0 0
        %1197 = vmatprep.subr.bf16.mxu0 0
        %1198 = vmatpush2.bf16.msra.mxu0 0
        %1199 = vmatprep.subr.bf16.mxu0 0
        %1200 = vmatpush2.bf16.msra.mxu0 0
        %1201 = vmatprep.subr.bf16.mxu0 0
        %1202 = vmatpush2.bf16.msra.mxu0 0
        %1203 = vmatprep.mubr.bf16.mxu0 0
        %1204 = vmatmul.mubr.bf16.gmra.mxu0 %v1166
        %v1205 = vpop.f32.mrf.mxu0
        %v1206 = vadd.f32 0.0, %v1205
        %v1207 = vpop.f32.mrf.mxu0
        %v1208 = vpop.f32.mrf.mxu0
        %v1209 = vpop.f32.mrf.mxu0
        %1210 = vdwg.mxu0
        %1211 = vrot.lane.b32.xlu0 %v890, 112
        %v1212 = vpop.permute.xlu0 %1211
        %v1214 = vsel %vm896, %v1212, 0
        %1216 = vmatprep.subr.bf16.mxu0 0
        %1217 = vmatpush1.bf16.msra.mxu0 0
        %1218 = vmatprep.subr.bf16.mxu0 0
        %1219 = vmatpush1.bf16.msra.mxu0 0
        %1220 = vmatprep.subr.bf16.mxu0 0
        %1221 = vmatpush1.bf16.msra.mxu0 0
        %1222 = vmatprep.subr.bf16.mxu0 0
        %1223 = vmatpush1.bf16.msra.mxu0 0
        %1224 = vmatprep.subr.bf16.mxu0 0
        %1225 = vmatpush1.bf16.msra.mxu0 0
        %1226 = vmatprep.subr.bf16.mxu0 0
        %1227 = vmatpush1.bf16.msra.mxu0 0
        %1228 = vmatprep.subr.bf16.mxu0 0
        %1229 = vmatpush1.bf16.msra.mxu0 0
        %1230 = vmatprep.subr.bf16.mxu0 0
        %1231 = vmatpush1.bf16.msra.mxu0 %v902
        %1232 = vmatprep.subr.bf16.mxu0 0
        %1233 = vmatpush2.bf16.msra.mxu0 0
        %1234 = vmatprep.subr.bf16.mxu0 0
        %1235 = vmatpush2.bf16.msra.mxu0 0
        %1236 = vmatprep.subr.bf16.mxu0 0
        %1237 = vmatpush2.bf16.msra.mxu0 0
        %1238 = vmatprep.subr.bf16.mxu0 0
        %1239 = vmatpush2.bf16.msra.mxu0 0
        %1240 = vmatprep.subr.bf16.mxu0 0
        %1241 = vmatpush2.bf16.msra.mxu0 0
        %1242 = vmatprep.subr.bf16.mxu0 0
        %1243 = vmatpush2.bf16.msra.mxu0 0
        %1244 = vmatprep.subr.bf16.mxu0 0
        %1245 = vmatpush2.bf16.msra.mxu0 0
        %1246 = vmatprep.subr.bf16.mxu0 0
        %1247 = vmatpush2.bf16.msra.mxu0 0
        %1248 = vmatprep.mubr.bf16.mxu0 0
        %1249 = vmatmul.mubr.bf16.gmra.mxu0 %v1214
        %v1250 = vpop.f32.mrf.mxu0
        %v1251 = vadd.f32 0.0, %v1250
        %v1252 = vpop.f32.mrf.mxu0
        %v1253 = vpop.f32.mrf.mxu0
        %v1254 = vpop.f32.mrf.mxu0
        %1255 = vdwg.mxu0
        %s1257 = sor.u32 256, 121
        %1258 = vrot.lane.b32.xlu0 %v1251, %s1257
        %v1259 = vpop.permute.xlu0 %1258
        %1260 = vrot.lane.b32.xlu0 %v891, 112
        %v1261 = vpop.permute.xlu0 %1260
        %v1263 = vsel %vm896, %v1261, 0
        %1265 = vmatprep.subr.bf16.mxu0 0
        %1266 = vmatpush1.bf16.xpose.msra.mxu0 0
        %1267 = vmatprep.subr.bf16.mxu0 0
        %1268 = vmatpush1.bf16.xpose.msra.mxu0 0
        %1269 = vmatprep.subr.bf16.mxu0 0
        %1270 = vmatpush1.bf16.xpose.msra.mxu0 0
        %1271 = vmatprep.subr.bf16.mxu0 0
        %1272 = vmatpush1.bf16.xpose.msra.mxu0 0
        %1273 = vmatprep.subr.bf16.mxu0 0
        %1274 = vmatpush1.bf16.xpose.msra.mxu0 0
        %1275 = vmatprep.subr.bf16.mxu0 0
        %1276 = vmatpush1.bf16.xpose.msra.mxu0 0
        %1277 = vmatprep.subr.bf16.mxu0 0
        %1278 = vmatpush1.bf16.xpose.msra.mxu0 0
        %1279 = vmatprep.subr.bf16.mxu0 0
        %1280 = vmatpush1.bf16.xpose.msra.mxu0 %v1263
        %1281 = vmatprep.subr.bf16.mxu0 0
        %1282 = vmatpush2.bf16.xpose.msra.mxu0 0
        %1283 = vmatprep.subr.bf16.mxu0 0
        %1284 = vmatpush2.bf16.xpose.msra.mxu0 0
        %1285 = vmatprep.subr.bf16.mxu0 0
        %1286 = vmatpush2.bf16.xpose.msra.mxu0 0
        %1287 = vmatprep.subr.bf16.mxu0 0
        %1288 = vmatpush2.bf16.xpose.msra.mxu0 0
        %1289 = vmatprep.subr.bf16.mxu0 0
        %1290 = vmatpush2.bf16.xpose.msra.mxu0 0
        %1291 = vmatprep.subr.bf16.mxu0 0
        %1292 = vmatpush2.bf16.xpose.msra.mxu0 0
        %1293 = vmatprep.subr.bf16.mxu0 0
        %1294 = vmatpush2.bf16.xpose.msra.mxu0 0
        %1295 = vmatprep.subr.bf16.mxu0 0
        %1296 = vmatpush2.bf16.xpose.msra.mxu0 0
        %1297 = vmatprep.mubr.bf16.mxu0 0
        %1298 = vmatmul.mubr.bf16.gmra.mxu0 %v1214
        %v1299 = vpop.f32.mrf.mxu0
        %v1300 = vadd.f32 %v1259, %v1299
        %v1301 = vpop.f32.mrf.mxu0
        %v1302 = vpop.f32.mrf.mxu0
        %v1303 = vpop.f32.mrf.mxu0
        %1304 = vdwg.mxu0
        %v1305 = vsel %vm993, %v1300, -1e+09
        %v1306 = vsel %vm896, %v1305, -inf
        %1307 = vmax.xlane.f32.xlu0 %v1306
        %v1308 = vpop.xlane.xlu0 %1307
        %v1309 = vsub.f32 %v1305, %v1308
        %v1310 = vmul.f32 %v1309, 1.442695
        %v1311 = vpow.pop %v1310
        %v1312 = vsel %vm896, %v1311, 0.0
        %1313 = vadd.xlane.f32.xlu0 %v1312
        %v1314 = vpop.xlane.xlu0 %1313
        %v1315 = vrcp.pop %v1314
        %v1316 = vmul.f32 %v1311, %v1315
        %v1317 = vpack.c.bf16 %v1316, %v1316
        %1318 = vrot.lane.b32.xlu0 %v892, 112
        %v1319 = vpop.permute.xlu0 %1318
        %v1321 = vsel %vm896, %v1317, 0
        %v1324 = vsel %vm900, %v1319, 0
        %1326 = vmatprep.subr.bf16.mxu0 0
        %1327 = vmatpush1.bf16.msra.mxu0 0
        %1328 = vmatprep.subr.bf16.mxu0 0
        %1329 = vmatpush1.bf16.msra.mxu0 0
        %1330 = vmatprep.subr.bf16.mxu0 0
        %1331 = vmatpush1.bf16.msra.mxu0 0
        %1332 = vmatprep.subr.bf16.mxu0 0
        %1333 = vmatpush1.bf16.msra.mxu0 0
        %1334 = vmatprep.subr.bf16.mxu0 0
        %1335 = vmatpush1.bf16.msra.mxu0 0
        %1336 = vmatprep.subr.bf16.mxu0 0
        %1337 = vmatpush1.bf16.msra.mxu0 0
        %1338 = vmatprep.subr.bf16.mxu0 0
        %1339 = vmatpush1.bf16.msra.mxu0 0
        %1340 = vmatprep.subr.bf16.mxu0 0
        %1341 = vmatpush1.bf16.msra.mxu0 %v1324
        %1342 = vmatprep.subr.bf16.mxu0 0
        %1343 = vmatpush2.bf16.msra.mxu0 0
        %1344 = vmatprep.subr.bf16.mxu0 0
        %1345 = vmatpush2.bf16.msra.mxu0 0
        %1346 = vmatprep.subr.bf16.mxu0 0
        %1347 = vmatpush2.bf16.msra.mxu0 0
        %1348 = vmatprep.subr.bf16.mxu0 0
        %1349 = vmatpush2.bf16.msra.mxu0 0
        %1350 = vmatprep.subr.bf16.mxu0 0
        %1351 = vmatpush2.bf16.msra.mxu0 0
        %1352 = vmatprep.subr.bf16.mxu0 0
        %1353 = vmatpush2.bf16.msra.mxu0 0
        %1354 = vmatprep.subr.bf16.mxu0 0
        %1355 = vmatpush2.bf16.msra.mxu0 0
        %1356 = vmatprep.subr.bf16.mxu0 0
        %1357 = vmatpush2.bf16.msra.mxu0 0
        %1358 = vmatprep.mubr.bf16.mxu0 0
        %1359 = vmatmul.mubr.bf16.gmra.mxu0 %v1321
        %v1360 = vpop.f32.mrf.mxu0
        %v1361 = vadd.f32 0.0, %v1360
        %v1362 = vpop.f32.mrf.mxu0
        %v1363 = vpop.f32.mrf.mxu0
        %v1364 = vpop.f32.mrf.mxu0
        %1365 = vdwg.mxu0
        %1366 = vrot.lane.b32.xlu0 %v890, 104
        %v1367 = vpop.permute.xlu0 %1366
        %v1369 = vsel %vm896, %v1367, 0
        %1371 = vmatprep.subr.bf16.mxu0 0
        %1372 = vmatpush1.bf16.msra.mxu0 0
        %1373 = vmatprep.subr.bf16.mxu0 0
        %1374 = vmatpush1.bf16.msra.mxu0 0
        %1375 = vmatprep.subr.bf16.mxu0 0
        %1376 = vmatpush1.bf16.msra.mxu0 0
        %1377 = vmatprep.subr.bf16.mxu0 0
        %1378 = vmatpush1.bf16.msra.mxu0 0
        %1379 = vmatprep.subr.bf16.mxu0 0
        %1380 = vmatpush1.bf16.msra.mxu0 0
        %1381 = vmatprep.subr.bf16.mxu0 0
        %1382 = vmatpush1.bf16.msra.mxu0 0
        %1383 = vmatprep.subr.bf16.mxu0 0
        %1384 = vmatpush1.bf16.msra.mxu0 0
        %1385 = vmatprep.subr.bf16.mxu0 0
        %1386 = vmatpush1.bf16.msra.mxu0 %v902
        %1387 = vmatprep.subr.bf16.mxu0 0
        %1388 = vmatpush2.bf16.msra.mxu0 0
        %1389 = vmatprep.subr.bf16.mxu0 0
        %1390 = vmatpush2.bf16.msra.mxu0 0
        %1391 = vmatprep.subr.bf16.mxu0 0
        %1392 = vmatpush2.bf16.msra.mxu0 0
        %1393 = vmatprep.subr.bf16.mxu0 0
        %1394 = vmatpush2.bf16.msra.mxu0 0
        %1395 = vmatprep.subr.bf16.mxu0 0
        %1396 = vmatpush2.bf16.msra.mxu0 0
        %1397 = vmatprep.subr.bf16.mxu0 0
        %1398 = vmatpush2.bf16.msra.mxu0 0
        %1399 = vmatprep.subr.bf16.mxu0 0
        %1400 = vmatpush2.bf16.msra.mxu0 0
        %1401 = vmatprep.subr.bf16.mxu0 0
        %1402 = vmatpush2.bf16.msra.mxu0 0
        %1403 = vmatprep.mubr.bf16.mxu0 0
        %1404 = vmatmul.mubr.bf16.gmra.mxu0 %v1369
        %v1405 = vpop.f32.mrf.mxu0
        %v1406 = vadd.f32 0.0, %v1405
        %v1407 = vpop.f32.mrf.mxu0
        %v1408 = vpop.f32.mrf.mxu0
        %v1409 = vpop.f32.mrf.mxu0
        %1410 = vdwg.mxu0
        %s1412 = sor.u32 256, 121
        %1413 = vrot.lane.b32.xlu0 %v1406, %s1412
        %v1414 = vpop.permute.xlu0 %1413
        %1415 = vrot.lane.b32.xlu0 %v891, 104
        %v1416 = vpop.permute.xlu0 %1415
        %v1418 = vsel %vm896, %v1416, 0
        %1420 = vmatprep.subr.bf16.mxu0 0
        %1421 = vmatpush1.bf16.xpose.msra.mxu0 0
        %1422 = vmatprep.subr.bf16.mxu0 0
        %1423 = vmatpush1.bf16.xpose.msra.mxu0 0
        %1424 = vmatprep.subr.bf16.mxu0 0
        %1425 = vmatpush1.bf16.xpose.msra.mxu0 0
        %1426 = vmatprep.subr.bf16.mxu0 0
        %1427 = vmatpush1.bf16.xpose.msra.mxu0 0
        %1428 = vmatprep.subr.bf16.mxu0 0
        %1429 = vmatpush1.bf16.xpose.msra.mxu0 0
        %1430 = vmatprep.subr.bf16.mxu0 0
        %1431 = vmatpush1.bf16.xpose.msra.mxu0 0
        %1432 = vmatprep.subr.bf16.mxu0 0
        %1433 = vmatpush1.bf16.xpose.msra.mxu0 0
        %1434 = vmatprep.subr.bf16.mxu0 0
        %1435 = vmatpush1.bf16.xpose.msra.mxu0 %v1418
        %1436 = vmatprep.subr.bf16.mxu0 0
        %1437 = vmatpush2.bf16.xpose.msra.mxu0 0
        %1438 = vmatprep.subr.bf16.mxu0 0
        %1439 = vmatpush2.bf16.xpose.msra.mxu0 0
        %1440 = vmatprep.subr.bf16.mxu0 0
        %1441 = vmatpush2.bf16.xpose.msra.mxu0 0
        %1442 = vmatprep.subr.bf16.mxu0 0
        %1443 = vmatpush2.bf16.xpose.msra.mxu0 0
        %1444 = vmatprep.subr.bf16.mxu0 0
        %1445 = vmatpush2.bf16.xpose.msra.mxu0 0
        %1446 = vmatprep.subr.bf16.mxu0 0
        %1447 = vmatpush2.bf16.xpose.msra.mxu0 0
        %1448 = vmatprep.subr.bf16.mxu0 0
        %1449 = vmatpush2.bf16.xpose.msra.mxu0 0
        %1450 = vmatprep.subr.bf16.mxu0 0
        %1451 = vmatpush2.bf16.xpose.msra.mxu0 0
        %1452 = vmatprep.mubr.bf16.mxu0 0
        %1453 = vmatmul.mubr.bf16.gmra.mxu0 %v1369
        %v1454 = vpop.f32.mrf.mxu0
        %v1455 = vadd.f32 %v1414, %v1454
        %v1456 = vpop.f32.mrf.mxu0
        %v1457 = vpop.f32.mrf.mxu0
        %v1458 = vpop.f32.mrf.mxu0
        %1459 = vdwg.mxu0
        %v1460 = vsel %vm993, %v1455, -1e+09
        %v1461 = vsel %vm896, %v1460, -inf
        %1462 = vmax.xlane.f32.xlu0 %v1461
        %v1463 = vpop.xlane.xlu0 %1462
        %v1464 = vsub.f32 %v1460, %v1463
        %v1465 = vmul.f32 %v1464, 1.442695
        %v1466 = vpow.pop %v1465
        %v1467 = vsel %vm896, %v1466, 0.0
        %1468 = vadd.xlane.f32.xlu0 %v1467
        %v1469 = vpop.xlane.xlu0 %1468
        %v1470 = vrcp.pop %v1469
        %v1471 = vmul.f32 %v1466, %v1470
        %v1472 = vpack.c.bf16 %v1471, %v1471
        %1473 = vrot.lane.b32.xlu0 %v892, 104
        %v1474 = vpop.permute.xlu0 %1473
        %v1476 = vsel %vm896, %v1472, 0
        %v1479 = vsel %vm900, %v1474, 0
        %1481 = vmatprep.subr.bf16.mxu0 0
        %1482 = vmatpush1.bf16.msra.mxu0 0
        %1483 = vmatprep.subr.bf16.mxu0 0
        %1484 = vmatpush1.bf16.msra.mxu0 0
        %1485 = vmatprep.subr.bf16.mxu0 0
        %1486 = vmatpush1.bf16.msra.mxu0 0
        %1487 = vmatprep.subr.bf16.mxu0 0
        %1488 = vmatpush1.bf16.msra.mxu0 0
        %1489 = vmatprep.subr.bf16.mxu0 0
        %1490 = vmatpush1.bf16.msra.mxu0 0
        %1491 = vmatprep.subr.bf16.mxu0 0
        %1492 = vmatpush1.bf16.msra.mxu0 0
        %1493 = vmatprep.subr.bf16.mxu0 0
        %1494 = vmatpush1.bf16.msra.mxu0 0
        %1495 = vmatprep.subr.bf16.mxu0 0
        %1496 = vmatpush1.bf16.msra.mxu0 %v1479
        %1497 = vmatprep.subr.bf16.mxu0 0
        %1498 = vmatpush2.bf16.msra.mxu0 0
        %1499 = vmatprep.subr.bf16.mxu0 0
        %1500 = vmatpush2.bf16.msra.mxu0 0
        %1501 = vmatprep.subr.bf16.mxu0 0
        %1502 = vmatpush2.bf16.msra.mxu0 0
        %1503 = vmatprep.subr.bf16.mxu0 0
        %1504 = vmatpush2.bf16.msra.mxu0 0
        %1505 = vmatprep.subr.bf16.mxu0 0
        %1506 = vmatpush2.bf16.msra.mxu0 0
        %1507 = vmatprep.subr.bf16.mxu0 0
        %1508 = vmatpush2.bf16.msra.mxu0 0
        %1509 = vmatprep.subr.bf16.mxu0 0
        %1510 = vmatpush2.bf16.msra.mxu0 0
        %1511 = vmatprep.subr.bf16.mxu0 0
        %1512 = vmatpush2.bf16.msra.mxu0 0
        %1513 = vmatprep.mubr.bf16.mxu0 0
        %1514 = vmatmul.mubr.bf16.gmra.mxu0 %v1476
        %v1515 = vpop.f32.mrf.mxu0
        %v1516 = vadd.f32 0.0, %v1515
        %v1517 = vpop.f32.mrf.mxu0
        %v1518 = vpop.f32.mrf.mxu0
        %v1519 = vpop.f32.mrf.mxu0
        %1520 = vdwg.mxu0
        %1522 = vrot.lane.b32.xlu0 %v1206, 8
        %v1523 = vpop.permute.xlu0 %1522
        %1526 = vrot.lane.b32.xlu0 %v1361, 16
        %v1527 = vpop.permute.xlu0 %1526
        %1530 = vrot.lane.b32.xlu0 %v1516, 24
        %v1531 = vpop.permute.xlu0 %1530
        %v1533 = vsel %vm896, %v1048, %v1523
        %vm1534 = vcmask 130048
        %v1535 = vsel %vm1534, %v1533, %v1527
        %vm1536 = vcmask 195584
        %v1537 = vsel %vm1536, %v1535, %v1531
        %v1538 = vpack.c.bf16 %v1537, %v1537
        %v1539 = vld [vmem:[#allocation8] sm:$0xf]
        %v1540 = vld [vmem:[#allocation8 + $0x4] sm:$0xf]
        %v1541 = vld [vmem:[#allocation8 + $0x8] sm:$0xf]
        %v1542 = vld [vmem:[#allocation8 + $0xc] sm:$0xf]
        %v1543 = vld [vmem:[%s10] sm:$0x1]
        %v1545 = vlaneseq
        %v1546 = vshrl.u32 %v1545, 7
        %v1547 = vsub.s32 0, %v1546
        %v1548 = vrot.slane %v1543, %v1547
        %v1554 = vunpack.c.l.b16 %v1539
        %v1555 = vunpack.c.l.b16 %v1540
        %v1556 = vunpack.c.l.b16 %v1541
        %v1557 = vunpack.c.l.b16 %v1542
        %v1558 = vpack.c.b16 %v1555, %v1554
        %v1559 = vpack.c.b16 %v1557, %v1556
        %v1563 = vsel %vm719, %v1538, 0
        %1565 = vmatprep.subr.bf16.mxu0 0
        %1566 = vmatpush1.bf16.msra.mxu0 0
        %1567 = vmatprep.subr.bf16.mxu0 0
        %1568 = vmatpush1.bf16.msra.mxu0 0
        %1569 = vmatprep.subr.bf16.mxu0 0
        %1570 = vmatpush1.bf16.msra.mxu0 0
        %1571 = vmatprep.subr.bf16.mxu0 0
        %1572 = vmatpush1.bf16.msra.mxu0 0
        %1573 = vmatprep.subr.bf16.mxu0 0
        %1574 = vmatpush1.bf16.msra.mxu0 0
        %1575 = vmatprep.subr.bf16.mxu0 0
        %1576 = vmatpush1.bf16.msra.mxu0 0
        %1577 = vmatprep.subr.bf16.mxu0 0
        %1578 = vmatpush1.bf16.msra.mxu0 %v1559
        %1579 = vmatprep.subr.bf16.mxu0 0
        %1580 = vmatpush1.bf16.msra.mxu0 %v1558
        %1581 = vmatprep.subr.bf16.mxu0 0
        %1582 = vmatpush2.bf16.msra.mxu0 0
        %1583 = vmatprep.subr.bf16.mxu0 0
        %1584 = vmatpush2.bf16.msra.mxu0 0
        %1585 = vmatprep.subr.bf16.mxu0 0
        %1586 = vmatpush2.bf16.msra.mxu0 0
        %1587 = vmatprep.subr.bf16.mxu0 0
        %1588 = vmatpush2.bf16.msra.mxu0 0
        %1589 = vmatprep.subr.bf16.mxu0 0
        %1590 = vmatpush2.bf16.msra.mxu0 0
        %1591 = vmatprep.subr.bf16.mxu0 0
        %1592 = vmatpush2.bf16.msra.mxu0 0
        %1593 = vmatprep.subr.bf16.mxu0 0
        %1594 = vmatpush2.bf16.msra.mxu0 0
        %1595 = vmatprep.subr.bf16.mxu0 0
        %1596 = vmatpush2.bf16.msra.mxu0 0
        %1597 = vmatprep.mubr.bf16.mxu0 0
        %1598 = vmatmul.mubr.bf16.gmra.mxu0 %v1563
        %v1599 = vpop.f32.mrf.mxu0
        %v1600 = vadd.f32 %v1548, %v1599
        %v1601 = vpop.f32.mrf.mxu0
        %v1602 = vpop.f32.mrf.mxu0
        %v1603 = vpop.f32.mrf.mxu0
        %1604 = vdwg.mxu0
        %v1605 = vadd.f32 %v694, %v1600
        %v1606 = vld [vmem:[%s11] sm:$0x1]
        %v1607 = vld [vmem:[%s12] sm:$0x1]
        %v1608 = vsel %vm719, %v1605, 0.0
        %1609 = vadd.xlane.f32.xlu0 %v1608
        %v1610 = vpop.xlane.xlu0 %1609
        %v1611 = vrcp.pop 32.0
        %v1612 = vmul.f32 %v1610, %v1611
        %v1613 = vsub.f32 %v1605, %v1612
        %v1614 = vmul.f32 %v1613, %v1613
        %v1615 = vsel %vm719, %v1614, 0.0
        %1616 = vadd.xlane.f32.xlu0 %v1615
        %v1617 = vpop.xlane.xlu0 %1616
        %v1618 = vmul.f32 %v1617, %v1611
        %v1619 = vadd.f32 %v1618, 1e-05
        %v1620 = vrsqrt.pop %v1619
        %v1621 = vmul.f32 %v1613, %v1620
        %v1623 = vlaneseq
        %v1624 = vshrl.u32 %v1623, 7
        %v1625 = vsub.s32 0, %v1624
        %v1626 = vrot.slane %v1606, %v1625
        %v1628 = vmul.f32 %v1621, %v1626
        %v1630 = vlaneseq
        %v1631 = vshrl.u32 %v1630, 7
        %v1632 = vsub.s32 0, %v1631
        %v1633 = vrot.slane %v1607, %v1632
        %v1635 = vadd.f32 %v1628, %v1633
        %v1636 = vpack.c.bf16 %v1635, %v1635
        %v1637 = vld [vmem:[#allocation10] sm:$0xf]
        %v1638 = vld [vmem:[#allocation10 + $0x4] sm:$0xf]
        %v1639 = vld [vmem:[#allocation10 + $0x8] sm:$0xf]
        %v1640 = vld [vmem:[#allocation10 + $0xc] sm:$0xf]
        %v1641 = vld [vmem:[%s14] sm:$0x1]
        %v1643 = vlaneseq
        %v1644 = vshrl.u32 %v1643, 7
        %v1645 = vsub.s32 0, %v1644
        %v1646 = vrot.slane %v1641, %v1645
        %v1652 = vunpack.c.l.b16 %v1637
        %v1653 = vunpack.c.l.b16 %v1638
        %v1654 = vunpack.c.l.b16 %v1639
        %v1655 = vunpack.c.l.b16 %v1640
        %v1656 = vpack.c.b16 %v1653, %v1652
        %v1657 = vpack.c.b16 %v1655, %v1654
        %v1661 = vsel %vm719, %v1636, 0
        %1663 = vmatprep.subr.bf16.mxu0 0
        %1664 = vmatpush1.bf16.msra.mxu0 0
        %1665 = vmatprep.subr.bf16.mxu0 0
        %1666 = vmatpush1.bf16.msra.mxu0 0
        %1667 = vmatprep.subr.bf16.mxu0 0
        %1668 = vmatpush1.bf16.msra.mxu0 0
        %1669 = vmatprep.subr.bf16.mxu0 0
        %1670 = vmatpush1.bf16.msra.mxu0 0
        %1671 = vmatprep.subr.bf16.mxu0 0
        %1672 = vmatpush1.bf16.msra.mxu0 0
        %1673 = vmatprep.subr.bf16.mxu0 0
        %1674 = vmatpush1.bf16.msra.mxu0 0
        %1675 = vmatprep.subr.bf16.mxu0 0
        %1676 = vmatpush1.bf16.msra.mxu0 %v1657
        %1677 = vmatprep.subr.bf16.mxu0 0
        %1678 = vmatpush1.bf16.msra.mxu0 %v1656
        %1679 = vmatprep.subr.bf16.mxu0 0
        %1680 = vmatpush2.bf16.msra.mxu0 0
        %1681 = vmatprep.subr.bf16.mxu0 0
        %1682 = vmatpush2.bf16.msra.mxu0 0
        %1683 = vmatprep.subr.bf16.mxu0 0
        %1684 = vmatpush2.bf16.msra.mxu0 0
        %1685 = vmatprep.subr.bf16.mxu0 0
        %1686 = vmatpush2.bf16.msra.mxu0 0
        %1687 = vmatprep.subr.bf16.mxu0 0
        %1688 = vmatpush2.bf16.msra.mxu0 0
        %1689 = vmatprep.subr.bf16.mxu0 0
        %1690 = vmatpush2.bf16.msra.mxu0 0
        %1691 = vmatprep.subr.bf16.mxu0 0
        %1692 = vmatpush2.bf16.msra.mxu0 0
        %1693 = vmatprep.subr.bf16.mxu0 0
        %1694 = vmatpush2.bf16.msra.mxu0 0
        %1695 = vmatprep.mubr.bf16.mxu0 0
        %1696 = vmatmul.mubr.bf16.gmra.mxu0 %v1661
        %v1697 = vpop.f32.mrf.mxu0
        %v1698 = vadd.f32 %v1646, %v1697
        %v1699 = vpop.f32.mrf.mxu0
        %v1700 = vpop.f32.mrf.mxu0
        %v1701 = vpop.f32.mrf.mxu0
        %1702 = vdwg.mxu0
        %v1703 = vmax.f32 %v1698, 0.0
        %v1704 = vpack.c.bf16 %v1703, %v1703
        %v1705 = vld [vmem:[%s15] sm:$0xf]
        %v1706 = vld [vmem:[%s15 + $0x4] sm:$0xf]
        %v1707 = vld [vmem:[%s15 + $0x8] sm:$0xf]
        %v1708 = vld [vmem:[%s15 + $0xc] sm:$0xf]
        %v1709 = vld [vmem:[%s15 + $0x10] sm:$0xf]
        %v1710 = vld [vmem:[%s15 + $0x14] sm:$0xf]
        %v1711 = vld [vmem:[%s15 + $0x18] sm:$0xf]
        %v1712 = vld [vmem:[%s15 + $0x1c] sm:$0xf]
        %v1713 = vld [vmem:[%s16] sm:$0x1]
        %v1715 = vlaneseq
        %v1716 = vshrl.u32 %v1715, 7
        %v1717 = vsub.s32 0, %v1716
        %v1718 = vrot.slane %v1713, %v1717
        %v1728 = vunpack.c.l.b16 %v1705
        %v1729 = vunpack.c.l.b16 %v1706
        %v1730 = vunpack.c.l.b16 %v1707
        %v1731 = vunpack.c.l.b16 %v1708
        %v1732 = vunpack.c.l.b16 %v1709
        %v1733 = vunpack.c.l.b16 %v1710
        %v1734 = vunpack.c.l.b16 %v1711
        %v1735 = vunpack.c.l.b16 %v1712
        %v1736 = vpack.c.b16 %v1729, %v1728
        %v1737 = vpack.c.b16 %v1731, %v1730
        %v1738 = vpack.c.b16 %v1733, %v1732
        %v1739 = vpack.c.b16 %v1735, %v1734
        %vm1744 = vcmask 523264
        %v1746 = vsel %vm1744, %v1704, 0
        %1748 = vmatprep.subr.bf16.mxu0 0
        %1749 = vmatpush1.bf16.msra.mxu0 0
        %1750 = vmatprep.subr.bf16.mxu0 0
        %1751 = vmatpush1.bf16.msra.mxu0 0
        %1752 = vmatprep.subr.bf16.mxu0 0
        %1753 = vmatpush1.bf16.msra.mxu0 0
        %1754 = vmatprep.subr.bf16.mxu0 0
        %1755 = vmatpush1.bf16.msra.mxu0 0
        %1756 = vmatprep.subr.bf16.mxu0 0
        %1757 = vmatpush1.bf16.msra.mxu0 %v1739
        %1758 = vmatprep.subr.bf16.mxu0 0
        %1759 = vmatpush1.bf16.msra.mxu0 %v1738
        %1760 = vmatprep.subr.bf16.mxu0 0
        %1761 = vmatpush1.bf16.msra.mxu0 %v1737
        %1762 = vmatprep.subr.bf16.mxu0 0
        %1763 = vmatpush1.bf16.msra.mxu0 %v1736
        %1764 = vmatprep.subr.bf16.mxu0 0
        %1765 = vmatpush2.bf16.msra.mxu0 0
        %1766 = vmatprep.subr.bf16.mxu0 0
        %1767 = vmatpush2.bf16.msra.mxu0 0
        %1768 = vmatprep.subr.bf16.mxu0 0
        %1769 = vmatpush2.bf16.msra.mxu0 0
        %1770 = vmatprep.subr.bf16.mxu0 0
        %1771 = vmatpush2.bf16.msra.mxu0 0
        %1772 = vmatprep.subr.bf16.mxu0 0
        %1773 = vmatpush2.bf16.msra.mxu0 0
        %1774 = vmatprep.subr.bf16.mxu0 0
        %1775 = vmatpush2.bf16.msra.mxu0 0
        %1776 = vmatprep.subr.bf16.mxu0 0
        %1777 = vmatpush2.bf16.msra.mxu0 0
        %1778 = vmatprep.subr.bf16.mxu0 0
        %1779 = vmatpush2.bf16.msra.mxu0 0
        %1780 = vmatprep.mubr.bf16.mxu0 0
        %1781 = vmatmul.mubr.bf16.gmra.mxu0 %v1746
        %v1782 = vpop.f32.mrf.mxu0
        %v1783 = vadd.f32 %v1718, %v1782
        %v1784 = vpop.f32.mrf.mxu0
        %v1785 = vpop.f32.mrf.mxu0
        %v1786 = vpop.f32.mrf.mxu0
        %1787 = vdwg.mxu0
        %v1788 = vadd.f32 %v1635, %v1783
        %v1789 = vld [vmem:[%s17] sm:$0x1]
        %v1790 = vld [vmem:[%s18] sm:$0x1]
        %v1791 = vsel %vm719, %v1788, 0.0
        %1792 = vadd.xlane.f32.xlu0 %v1791
        %v1793 = vpop.xlane.xlu0 %1792
        %v1794 = vmul.f32 %v1793, %v1611
        %v1795 = vsub.f32 %v1788, %v1794
        %v1796 = vmul.f32 %v1795, %v1795
        %v1797 = vsel %vm719, %v1796, 0.0
        %1798 = vadd.xlane.f32.xlu0 %v1797
        %v1799 = vpop.xlane.xlu0 %1798
        %v1800 = vmul.f32 %v1799, %v1611
        %v1801 = vadd.f32 %v1800, 1e-05
        %v1802 = vrsqrt.pop %v1801
        %v1803 = vmul.f32 %v1795, %v1802
        %v1805 = vlaneseq
        %v1806 = vshrl.u32 %v1805, 7
        %v1807 = vsub.s32 0, %v1806
        %v1808 = vrot.slane %v1789, %v1807
        %v1810 = vmul.f32 %v1803, %v1808
        %v1812 = vlaneseq
        %v1813 = vshrl.u32 %v1812, 7
        %v1814 = vsub.s32 0, %v1813
        %v1815 = vrot.slane %v1790, %v1814
        %v1817 = vadd.f32 %v1810, %v1815
        %1818 = vst.msk [vmem:[%s686] sm:$0xff] %vm719, %v1817
        %s1819 = sand.u32 %s455, 1
        %s1820 = scalar_lea.sflag [#allocation4], %s1819
        %s1821 = sand.u32 %s455, 1
        %s1822 = smul.addr %s1821, 8
        %s1823 = scalar_lea.vmem [#allocation11], %s1822
        // Predicated region
        $region117: #{tpu_custom_call.1} parent=95 // pred_check
          %p1824 = pneg %p465
        $region118: #{tpu_custom_call.1} parent=95 // pred_check_branch
          %1826 = sbr.rel (%p1824) target = $region120
        $region119: #{tpu_custom_call.1} parent=95 // pred_region
          %s1828 = ssub.s32 128, 128
          %1829 = vsyncadd %s1820, %s1828
          %s1830 = smul.addr %s38, 128
          %s1831 = scalar_lea.hbm %s19, %s1830
          %s1833 = sshll.u32 %s1823, 4
          %s1834 = int_to_ptr.vmem [resolvable:$true] %s1833
          %1836 = dma.vmem_to_hbm [thread:$0]  %s1834, 128, %s1831, %s1820
        $region120: #{tpu_custom_call.1} parent=95 // pred_fallthru
          _
      $region96: #{tpu_custom_call.1} parent=5 // pred_fallthru
        _
      %p1837 = scmp.le.s32.totalorder 2, %s33
      // Predicated region
      $region121: #{tpu_custom_call.1} parent=5 // pred_check
        %p1838 = pneg %p1837
      $region122: #{tpu_custom_call.1} parent=5 // pred_check_branch
        %1840 = sbr.rel (%p1838) target = $region124
      $region123: #{tpu_custom_call.1} parent=5 // pred_region
        %s1841 = ssub.s32 %s33, 2
        // Predicated region
        $region125: #{tpu_custom_call.1} parent=123 // pred_check
          %p1842 = pneg %p471
        $region126: #{tpu_custom_call.1} parent=123 // pred_check_branch
          %1844 = sbr.rel (%p1842) target = $region128
        $region127: #{tpu_custom_call.1} parent=123 // pred_region
          %s1845 = sand.u32 %s456, 1
          %s1846 = scalar_lea.sflag [#allocation4], %s1845
          %s1847 = sand.u32 %s456, 1
          %s1848 = smul.addr %s1847, 8
          %s1849 = scalar_lea.vmem [#allocation11], %s1848
          %1850 = dma.done %s1846, 128
        $region128: #{tpu_custom_call.1} parent=123 // pred_fallthru
          _
      $region124: #{tpu_custom_call.1} parent=5 // pred_fallthru
        _
    $region6: #{tpu_custom_call.1} parent=1 // loop_footer
      %s37 = sadd.s32 1, %s33
    $region7: #{tpu_custom_call.1} parent=1 // loop_footer_branch
      %32 = sbr.rel target = $region3
    $region8: #{tpu_custom_call.1} parent=1 // loop_exit
      _
    %1851 = vsyncpa [#allocation3], 1
    %s1852 = scalar_lea.sflag [#allocation3], 1
    %1853 = vsyncpa %s1852, 1
    %1854 = vsyncpa [#allocation6], 1
    %1855 = vsyncpa [#allocation9], 1
    %1856 = vsyncpa [#allocation4], 1
    %s1857 = scalar_lea.sflag [#allocation4], 1
    %1858 = vsyncpa %s1857, 1

</llo_original>
